<compile_context>
chip_gen: v7x
topology: tpu7x:2x2x1
jax: 0.10.0
libtpu: 0.0.40
codegen_flags: <defaults>
</compile_context>

<pallas_src>
import math
from functools import partial

import jax
import jax.numpy as jnp
from jax import lax
from jax.experimental import pallas as pl
from jax.experimental.pallas import tpu as pltpu

LN_EPS = 1e-6


def _normalize(v):
    # Plain LayerNorm normalization (no affine); v: (N, H) f32.
    mu = jnp.mean(v, axis=-1, keepdims=True)
    c = v - mu
    var = jnp.mean(c * c, axis=-1, keepdims=True)
    return c * lax.rsqrt(var + LN_EPS)


def _encoder_kernel(
    x_ref, pos_ref,
    qkvw_ref, qkvb_ref,
    outw_ref, outb_ref,
    fc1w_ref, fc1b_ref,
    fc2w_ref, fc2b_ref,
    lnfw_ref, lnfb_ref,
    o_ref,
    *, num_heads,
):
    B, S, H = o_ref.shape                      # B here is the batch *tile*
    hd = H // num_heads
    N = B * S
    layer = pl.program_id(1)
    n_layers = pl.num_programs(1)

    # Layer 0: seed the resident output buffer with input + pos_embedding.
    # (the Dropout right after the pos-embedding add is identity in eval mode)
    @pl.when(layer == 0)
    def _():
        o_ref[...] = x_ref[...] + pos_ref[...]

    x = o_ref[...].reshape(N, H)               # f32 residual stream

    # ----- attention branch: ln_1 (affine folded) -> fused QKV -> SDPA -> out-proj -----
    h = _normalize(x).astype(jnp.bfloat16)
    # Single full-width QKV projection: (N, H) @ (H, 3H).
    # Attention scale and ln_1 gamma/beta are already folded into the weights/bias.
    qkv = jnp.dot(h, qkvw_ref[0], preferred_element_type=jnp.float32) + qkvb_ref[0]

    heads = []
    for hh in range(num_heads):                # static per-head loop for the SDPA core only
        q = qkv[:, hh * hd:(hh + 1) * hd].reshape(B, S, hd).astype(jnp.bfloat16)
        k = qkv[:, H + hh * hd:H + (hh + 1) * hd].reshape(B, S, hd).astype(jnp.bfloat16)
        v = qkv[:, 2 * H + hh * hd:2 * H + (hh + 1) * hd].reshape(B, S, hd).astype(jnp.bfloat16)

        s = jnp.einsum("bqd,bkd->bqk", q, k, preferred_element_type=jnp.float32)
        m = jnp.max(s, axis=-1, keepdims=True)
        e = jnp.exp(s - m)
        inv = pl.reciprocal(jnp.sum(e, axis=-1, keepdims=True), approx=True)
        p = (e * inv).astype(jnp.bfloat16)
        # attention_dropout is identity (eval mode)
        oh = jnp.einsum("bqk,bkd->bqd", p, v, preferred_element_type=jnp.float32)
        heads.append(oh.reshape(N, hd))

    # Single full-width out-projection: (N, H) @ (H, H)
    concat = jnp.concatenate(heads, axis=-1).astype(jnp.bfloat16)
    attn = jnp.dot(concat, outw_ref[0], preferred_element_type=jnp.float32) + outb_ref[0]
    # post-attention dropout is identity (eval mode)
    x = x + attn

    # ----- MLP branch: ln_2 (affine folded) -> Linear -> GELU -> Linear -> residual ----
    y = _normalize(x).astype(jnp.bfloat16)
    y = jnp.dot(y, fc1w_ref[0], preferred_element_type=jnp.float32) + fc1b_ref[0]
    y = jax.nn.gelu(y, approximate=True)       # f32 nonlinearity
    y = jnp.dot(y.astype(jnp.bfloat16), fc2w_ref[0],
                preferred_element_type=jnp.float32) + fc2b_ref[0]
    x = x + y

    @pl.when(layer < n_layers - 1)
    def _():
        o_ref[...] = x.reshape(B, S, H)

    # Last layer: fuse the encoder's final LayerNorm (self.ln) — affine kept explicit.
    @pl.when(layer == n_layers - 1)
    def _():
        o_ref[...] = (_normalize(x) * lnfw_ref[...] + lnfb_ref[...]).reshape(B, S, H)


def make_params(key, num_layers, seq_len, hidden, mlp_dim, num_heads):
    """Synthetic parameters in PyTorch shapes, repacked (transposed, fused, folded, bf16)."""
    L, S, H, mlp, nh = num_layers, seq_len, hidden, mlp_dim, num_heads
    hd = H // nh
    scale = 1.0 / math.sqrt(hd)
    keys = jax.random.split(key, 1 + 8 * L)
    pos = 0.02 * jax.random.normal(keys[0], (1, S, H), jnp.float32)

    qkv_w, qkv_b, out_w, out_b = [], [], [], []
    fc1_w, fc1_b, fc2_w, fc2_b = [], [], [], []
    for i in range(L):
        k = keys[1 + 8 * i: 1 + 8 * (i + 1)]
        in_w = 0.02 * jax.random.normal(k[0], (3 * H, H), jnp.float32)   # in_proj_weight
        in_b = 0.02 * jax.random.normal(k[1], (3 * H,), jnp.float32)     # in_proj_bias
        o_w = 0.02 * jax.random.normal(k[2], (H, H), jnp.float32)        # out_proj.weight
        o_b = 0.02 * jax.random.normal(k[3], (H,), jnp.float32)
        f1_w = 0.02 * jax.random.normal(k[4], (mlp, H), jnp.float32)
        f1_b = 0.02 * jax.random.normal(k[5], (mlp,), jnp.float32)
        f2_w = 0.02 * jax.random.normal(k[6], (H, mlp), jnp.float32)
        f2_b = 0.02 * jax.random.normal(k[7], (H,), jnp.float32)
        # LayerNorm affines (identity at init; fold is general for trained params too).
        ln1_g, ln1_b = jnp.ones((H,), jnp.float32), jnp.zeros((H,), jnp.float32)
        ln2_g, ln2_b = jnp.ones((H,), jnp.float32), jnp.zeros((H,), jnp.float32)

        wq, wk, wv = in_w[:H], in_w[H:2 * H], in_w[2 * H:]
        bq, bk, bv = in_b[:H], in_b[H:2 * H], in_b[2 * H:]
        # transpose to (in, out), fuse [Q|K|V] along the lane dim, fold scale into Q.
        W = jnp.concatenate([wq.T * scale, wk.T, wv.T], axis=1)          # (H, 3H)
        b = jnp.concatenate([bq * scale, bk, bv])                        # (3H,)
        # fold ln_1 affine: (n*g + beta) @ W + b == n @ (g[:,None]*W) + (beta @ W + b)
        qkv_w.append(ln1_g[:, None] * W)
        qkv_b.append((b + ln1_b @ W).reshape(1, 3 * H))
        out_w.append(o_w.T)                                              # (H, H)
        out_b.append(o_b.reshape(1, H))
        F1 = f1_w.T                                                      # (H, mlp)
        # fold ln_2 affine into fc1
        fc1_w.append(ln2_g[:, None] * F1)
        fc1_b.append((f1_b + ln2_b @ F1).reshape(1, mlp))
        fc2_w.append(f2_w.T)                                             # (mlp, H)
        fc2_b.append(f2_b.reshape(1, H))

    stk = lambda xs, dt: jnp.stack(xs, axis=0).astype(dt)
    return dict(
        pos=pos,
        qkv_w=stk(qkv_w, jnp.bfloat16), qkv_b=stk(qkv_b, jnp.float32),
        out_w=stk(out_w, jnp.bfloat16), out_b=stk(out_b, jnp.float32),
        fc1_w=stk(fc1_w, jnp.bfloat16), fc1_b=stk(fc1_b, jnp.float32),
        fc2_w=stk(fc2_w, jnp.bfloat16), fc2_b=stk(fc2_b, jnp.float32),
        lnf_w=jnp.ones((1, H), jnp.float32), lnf_b=jnp.zeros((1, H), jnp.float32),
    )


def vit_encoder(x, params, num_heads, *, batch_tile=None):
    B, S, H = x.shape
    L = params["qkv_w"].shape[0]
    mlp = params["fc1_b"].shape[-1]
    tb = batch_tile if batch_tile is not None else B
    assert B % tb == 0, (B, tb)
    n_bt = B // tb

    def layer_spec(shape):      # per-layer stacked param: pick slab `l`
        zeros = (0,) * len(shape)
        return pl.BlockSpec((1,) + shape, lambda b, l, z=zeros: (l,) + z)

    def fixed_spec(shape):      # layer/batch-invariant array: always block (0, ...)
        zeros = (0,) * len(shape)
        return pl.BlockSpec(shape, lambda b, l, z=zeros: z)

    in_specs = [
        pl.BlockSpec((tb, S, H), lambda b, l: (b, 0, 0)),     # x (batch-tiled)
        fixed_spec((1, S, H)),                                # pos_embedding
        layer_spec((H, 3 * H)),                               # fused QKV weight (bf16)
        layer_spec((1, 3 * H)),                               # fused QKV bias (f32)
        layer_spec((H, H)), layer_spec((1, H)),               # out-proj w, b
        layer_spec((H, mlp)), layer_spec((1, mlp)),           # fc1 w, b
        layer_spec((mlp, H)), layer_spec((1, H)),             # fc2 w, b
        fixed_spec((1, H)), fixed_spec((1, H)),               # final ln w, b
    ]
    out_spec = pl.BlockSpec((tb, S, H), lambda b, l: (b, 0, 0))

    # Advisory cost hint for the surrounding XLA schedule.
    flops = L * B * (2 * S * H * 3 * H          # QKV projection
                     + 4 * S * S * H            # QK^T + PV (summed over heads)
                     + 2 * S * H * H            # out-projection
                     + 4 * S * H * mlp)         # fc1 + fc2
    transcendentals = L * B * (num_heads * S * S + S * mlp)
    weight_bytes = L * (3 * H * H + H * H + 2 * H * mlp) * 2 \
        + L * (3 * H + H + mlp + H) * 4
    bytes_accessed = weight_bytes + 2 * B * S * H * 4 + S * H * 4
    cost = pl.CostEstimate(flops=flops, transcendentals=transcendentals,
                           bytes_accessed=bytes_accessed)

    return pl.pallas_call(
        partial(_encoder_kernel, num_heads=num_heads),
        out_shape=jax.ShapeDtypeStruct((B, S, H), jnp.float32),
        grid_spec=pltpu.PrefetchScalarGridSpec(
            num_scalar_prefetch=0,
            grid=(n_bt, L),
            in_specs=in_specs,
            out_specs=out_spec,
        ),
        compiler_params=pltpu.CompilerParams(
            # batch tiles shard across TensorCores (megacore); layers are the
            # sequential carry axis for the resident activation.
            dimension_semantics=("parallel", "arbitrary"),
            # explicit scoped-VMEM budget: above the 16/32 MiB defaults, below v7x's
            # 64 MiB physical capacity (bf16 weights keep double-buffering under it).
            vmem_limit_bytes=56 * 1024 * 1024,
        ),
        cost_estimate=cost,
    )(
        x, params["pos"],
        params["qkv_w"], params["qkv_b"],
        params["out_w"], params["out_b"],
        params["fc1_w"], params["fc1_b"],
        params["fc2_w"], params["fc2_b"],
        params["lnf_w"], params["lnf_b"],
    )


if __name__ == "__main__":
    # small shapes consistent with the module: (B, S, H) with H % num_heads == 0
    B, SEQ, HID, HEADS, MLP, LAYERS = 2, 8, 32, 4, 64, 2

    key = jax.random.PRNGKey(0)
    k_x, k_p = jax.random.split(key)
    x = jax.random.normal(k_x, (B, SEQ, HID), jnp.float32)
    params = make_params(k_p, LAYERS, SEQ, HID, MLP, HEADS)

    out = vit_encoder(x, params, HEADS, batch_tile=1)   # 2 batch tiles -> parallel axis
    out = jax.block_until_ready(out)

    assert out.shape == (B, SEQ, HID), out.shape
    assert bool(jnp.all(jnp.isfinite(out)))
    print("KERNEL_OK")
</pallas_src>

<mosaic_0001>
module attributes {stable_mosaic.version = 11 : i64} {
  func.func @_encoder_kernel(%arg0: i32, %arg1: i32, %arg2: memref<1x8x32xf32, #tpu.memory_space<vmem>>, %arg3: memref<1x8x32xf32, #tpu.memory_space<vmem>>, %arg4: memref<1x32x96xbf16, #tpu.memory_space<vmem>>, %arg5: memref<1x1x96xf32, #tpu.memory_space<vmem>>, %arg6: memref<1x32x32xbf16, #tpu.memory_space<vmem>>, %arg7: memref<1x1x32xf32, #tpu.memory_space<vmem>>, %arg8: memref<1x32x64xbf16, #tpu.memory_space<vmem>>, %arg9: memref<1x1x64xf32, #tpu.memory_space<vmem>>, %arg10: memref<1x64x32xbf16, #tpu.memory_space<vmem>>, %arg11: memref<1x1x32xf32, #tpu.memory_space<vmem>>, %arg12: memref<1x32xf32, #tpu.memory_space<vmem>>, %arg13: memref<1x32xf32, #tpu.memory_space<vmem>>, %arg14: memref<1x8x32xf32, #tpu.memory_space<vmem>>) attributes {dimension_semantics = [#tpu.dimension_semantics<parallel>, #tpu.dimension_semantics<arbitrary>], iteration_bounds = array<i64: 2, 2>, scalar_prefetch = 0 : i64, scratch_operands = 0 : i64, tpu.core_type = #tpu.core_type<tc>, window_params = [{transform_indices = @transform_0, window_bounds = array<i64: 1, 8, 32>}, {pipeline_mode = #tpu.pipeline_mode<synchronous>, transform_indices = @transform_1, window_bounds = array<i64: 1, 8, 32>}, {transform_indices = @transform_2, window_bounds = array<i64: 1, 32, 96>}, {transform_indices = @transform_3, window_bounds = array<i64: 1, 1, 96>}, {transform_indices = @transform_4, window_bounds = array<i64: 1, 32, 32>}, {transform_indices = @transform_5, window_bounds = array<i64: 1, 1, 32>}, {transform_indices = @transform_6, window_bounds = array<i64: 1, 32, 64>}, {transform_indices = @transform_7, window_bounds = array<i64: 1, 1, 64>}, {transform_indices = @transform_8, window_bounds = array<i64: 1, 64, 32>}, {transform_indices = @transform_9, window_bounds = array<i64: 1, 1, 32>}, {pipeline_mode = #tpu.pipeline_mode<synchronous>, transform_indices = @transform_10, window_bounds = array<i64: 1, 32>}, {pipeline_mode = #tpu.pipeline_mode<synchronous>, transform_indices = @transform_11, window_bounds = array<i64: 1, 32>}, {transform_indices = @transform_12, window_bounds = array<i64: 1, 8, 32>}]} {
    %c0_i32 = arith.constant 0 : i32
    %0 = arith.cmpi eq, %arg1, %c0_i32 : i32
    %1 = arith.extui %0 : i1 to i32
    %c0_i32_0 = arith.constant 0 : i32
    %2 = arith.cmpi ne, %1, %c0_i32_0 : i32
    scf.if %2 {
      %c0_63 = arith.constant 0 : index
      %c0_64 = arith.constant 0 : index
      %c0_65 = arith.constant 0 : index
      %183 = vector.load %arg2[%c0_63, %c0_64, %c0_65] : memref<1x8x32xf32, #tpu.memory_space<vmem>>, vector<1x8x32xf32>
      %c0_66 = arith.constant 0 : index
      %c0_67 = arith.constant 0 : index
      %c0_68 = arith.constant 0 : index
      %184 = vector.load %arg3[%c0_66, %c0_67, %c0_68] : memref<1x8x32xf32, #tpu.memory_space<vmem>>, vector<1x8x32xf32>
      %185 = arith.addf %183, %184 : vector<1x8x32xf32>
      %c0_69 = arith.constant 0 : index
      %c0_70 = arith.constant 0 : index
      %c0_71 = arith.constant 0 : index
      %186 = vector.load %arg14[%c0_69, %c0_70, %c0_71] : memref<1x8x32xf32, #tpu.memory_space<vmem>>, vector<1x8x32xf32>
      tpu.vector_store %arg14[%c0_69, %c0_70, %c0_71], %185 {strides = array<i32>} : memref<1x8x32xf32, #tpu.memory_space<vmem>>, vector<1x8x32xf32>,
    } else {
    }
    %c0 = arith.constant 0 : index
    %c0_1 = arith.constant 0 : index
    %c0_2 = arith.constant 0 : index
    %3 = vector.load %arg14[%c0, %c0_1, %c0_2] : memref<1x8x32xf32, #tpu.memory_space<vmem>>, vector<1x8x32xf32>
    %4 = vector.shape_cast %3 : vector<1x8x32xf32> to vector<8x32xf32>
    %cst = arith.constant dense<0.000000e+00> : vector<8xf32>
    %5 = vector.multi_reduction <add>, %4, %cst [1] : vector<8x32xf32> to vector<8xf32>
    %6 = vector.shape_cast %5 : vector<8xf32> to vector<8x1xf32>
    %cst_3 = arith.constant 3.200000e+01 : f32
    %7 = vector.broadcast %cst_3 : f32 to vector<8x1xf32>
    %8 = arith.divf %6, %7 : vector<8x1xf32>
    %9 = vector.broadcast %8 : vector<8x1xf32> to vector<8x32xf32>
    %10 = arith.subf %4, %9 : vector<8x32xf32>
    %11 = arith.mulf %10, %10 : vector<8x32xf32>
    %cst_4 = arith.constant dense<0.000000e+00> : vector<8xf32>
    %12 = vector.multi_reduction <add>, %11, %cst_4 [1] : vector<8x32xf32> to vector<8xf32>
    %13 = vector.shape_cast %12 : vector<8xf32> to vector<8x1xf32>
    %cst_5 = arith.constant 3.200000e+01 : f32
    %14 = vector.broadcast %cst_5 : f32 to vector<8x1xf32>
    %15 = arith.divf %13, %14 : vector<8x1xf32>
    %cst_6 = arith.constant 9.99999997E-7 : f32
    %16 = vector.broadcast %cst_6 : f32 to vector<8x1xf32>
    %17 = arith.addf %15, %16 : vector<8x1xf32>
    %18 = math.rsqrt %17 : vector<8x1xf32>
    %19 = vector.broadcast %18 : vector<8x1xf32> to vector<8x32xf32>
    %20 = arith.mulf %10, %19 : vector<8x32xf32>
    %21 = arith.truncf %20 : vector<8x32xf32> to vector<8x32xbf16>
    %c0_7 = arith.constant 0 : index
    %c0_8 = arith.constant 0 : index
    %c0_9 = arith.constant 0 : index
    %22 = vector.load %arg4[%c0_7, %c0_8, %c0_9] : memref<1x32x96xbf16, #tpu.memory_space<vmem>>, vector<1x32x96xbf16>
    %23 = vector.shape_cast %22 : vector<1x32x96xbf16> to vector<32x96xbf16>
    %cst_10 = arith.constant dense<0.000000e+00> : vector<8x96xf32>
    %24 = tpu.matmul %21, %23, %cst_10 {dimension_numbers = #tpu.dot_dimension_numbers<[1], [0], [0], [1], [0, 0, 1, 1], [], []>} : vector<8x32xbf16>, vector<32x96xbf16>, vector<8x96xf32> -> vector<8x96xf32>
    %c0_11 = arith.constant 0 : index
    %c0_12 = arith.constant 0 : index
    %c0_13 = arith.constant 0 : index
    %25 = vector.load %arg5[%c0_11, %c0_12, %c0_13] : memref<1x1x96xf32, #tpu.memory_space<vmem>>, vector<1x1x96xf32>
    %26 = vector.shape_cast %25 : vector<1x1x96xf32> to vector<1x96xf32>
    %27 = vector.broadcast %26 : vector<1x96xf32> to vector<8x96xf32>
    %28 = arith.addf %24, %27 : vector<8x96xf32>
    %29 = vector.extract_strided_slice %28 {offsets = [0, 0], sizes = [8, 8], strides = [1, 1]} : vector<8x96xf32> to vector<8x8xf32>
    %30 = vector.shape_cast %29 : vector<8x8xf32> to vector<1x8x8xf32>
    %31 = arith.truncf %30 : vector<1x8x8xf32> to vector<1x8x8xbf16>
    %32 = vector.extract_strided_slice %28 {offsets = [0, 32], sizes = [8, 8], strides = [1, 1]} : vector<8x96xf32> to vector<8x8xf32>
    %33 = vector.shape_cast %32 : vector<8x8xf32> to vector<1x8x8xf32>
    %34 = arith.truncf %33 : vector<1x8x8xf32> to vector<1x8x8xbf16>
    %35 = vector.extract_strided_slice %28 {offsets = [0, 64], sizes = [8, 8], strides = [1, 1]} : vector<8x96xf32> to vector<8x8xf32>
    %36 = vector.shape_cast %35 : vector<8x8xf32> to vector<1x8x8xf32>
    %37 = arith.truncf %36 : vector<1x8x8xf32> to vector<1x8x8xbf16>
    "tpu.trace_start"() <{level = 10 : i32, message = "bqd,bkd->bqk"}> : () -> ()
    %cst_14 = arith.constant dense<0.000000e+00> : vector<1x8x8xf32>
    %38 = tpu.matmul %31, %34, %cst_14 {dimension_numbers = #tpu.dot_dimension_numbers<[2], [2], [1], [1], [0, 0, 0, 1, 1, 1], [0], [0]>} : vector<1x8x8xbf16>, vector<1x8x8xbf16>, vector<1x8x8xf32> -> vector<1x8x8xf32>
    "tpu.trace_stop"() : () -> ()
    %cst_15 = arith.constant dense<0xFF800000> : vector<1x8xf32>
    %39 = vector.multi_reduction <maximumf>, %38, %cst_15 [2] : vector<1x8x8xf32> to vector<1x8xf32>
    %40 = vector.shape_cast %39 : vector<1x8xf32> to vector<1x8x1xf32>
    %41 = vector.broadcast %40 : vector<1x8x1xf32> to vector<1x8x8xf32>
    %42 = arith.subf %38, %41 : vector<1x8x8xf32>
    %43 = math.exp %42 : vector<1x8x8xf32>
    %cst_16 = arith.constant dense<0.000000e+00> : vector<1x8xf32>
    %44 = vector.multi_reduction <add>, %43, %cst_16 [2] : vector<1x8x8xf32> to vector<1x8xf32>
    %45 = vector.shape_cast %44 : vector<1x8xf32> to vector<1x8x1xf32>
    %46 = tpu.reciprocal %45 {approx = true} : vector<1x8x1xf32> -> vector<1x8x1xf32>
    %47 = vector.broadcast %46 : vector<1x8x1xf32> to vector<1x8x8xf32>
    %48 = arith.mulf %43, %47 : vector<1x8x8xf32>
    %49 = arith.truncf %48 : vector<1x8x8xf32> to vector<1x8x8xbf16>
    "tpu.trace_start"() <{level = 10 : i32, message = "bqk,bkd->bqd"}> : () -> ()
    %cst_17 = arith.constant dense<0.000000e+00> : vector<1x8x8xf32>
    %50 = tpu.matmul %49, %37, %cst_17 {dimension_numbers = #tpu.dot_dimension_numbers<[2], [1], [1], [2], [0, 0, 0, 1, 1, 2], [0], [0]>} : vector<1x8x8xbf16>, vector<1x8x8xbf16>, vector<1x8x8xf32> -> vector<1x8x8xf32>
    "tpu.trace_stop"() : () -> ()
    %51 = vector.shape_cast %50 : vector<1x8x8xf32> to vector<8x8xf32>
    %52 = vector.extract_strided_slice %28 {offsets = [0, 8], sizes = [8, 8], strides = [1, 1]} : vector<8x96xf32> to vector<8x8xf32>
    %53 = vector.shape_cast %52 : vector<8x8xf32> to vector<1x8x8xf32>
    %54 = arith.truncf %53 : vector<1x8x8xf32> to vector<1x8x8xbf16>
    %55 = vector.extract_strided_slice %28 {offsets = [0, 40], sizes = [8, 8], strides = [1, 1]} : vector<8x96xf32> to vector<8x8xf32>
    %56 = vector.shape_cast %55 : vector<8x8xf32> to vector<1x8x8xf32>
    %57 = arith.truncf %56 : vector<1x8x8xf32> to vector<1x8x8xbf16>
    %58 = vector.extract_strided_slice %28 {offsets = [0, 72], sizes = [8, 8], strides = [1, 1]} : vector<8x96xf32> to vector<8x8xf32>
    %59 = vector.shape_cast %58 : vector<8x8xf32> to vector<1x8x8xf32>
    %60 = arith.truncf %59 : vector<1x8x8xf32> to vector<1x8x8xbf16>
    "tpu.trace_start"() <{level = 10 : i32, message = "bqd,bkd->bqk"}> : () -> ()
    %cst_18 = arith.constant dense<0.000000e+00> : vector<1x8x8xf32>
    %61 = tpu.matmul %54, %57, %cst_18 {dimension_numbers = #tpu.dot_dimension_numbers<[2], [2], [1], [1], [0, 0, 0, 1, 1, 1], [0], [0]>} : vector<1x8x8xbf16>, vector<1x8x8xbf16>, vector<1x8x8xf32> -> vector<1x8x8xf32>
    "tpu.trace_stop"() : () -> ()
    %cst_19 = arith.constant dense<0xFF800000> : vector<1x8xf32>
    %62 = vector.multi_reduction <maximumf>, %61, %cst_19 [2] : vector<1x8x8xf32> to vector<1x8xf32>
    %63 = vector.shape_cast %62 : vector<1x8xf32> to vector<1x8x1xf32>
    %64 = vector.broadcast %63 : vector<1x8x1xf32> to vector<1x8x8xf32>
    %65 = arith.subf %61, %64 : vector<1x8x8xf32>
    %66 = math.exp %65 : vector<1x8x8xf32>
    %cst_20 = arith.constant dense<0.000000e+00> : vector<1x8xf32>
    %67 = vector.multi_reduction <add>, %66, %cst_20 [2] : vector<1x8x8xf32> to vector<1x8xf32>
    %68 = vector.shape_cast %67 : vector<1x8xf32> to vector<1x8x1xf32>
    %69 = tpu.reciprocal %68 {approx = true} : vector<1x8x1xf32> -> vector<1x8x1xf32>
    %70 = vector.broadcast %69 : vector<1x8x1xf32> to vector<1x8x8xf32>
    %71 = arith.mulf %66, %70 : vector<1x8x8xf32>
    %72 = arith.truncf %71 : vector<1x8x8xf32> to vector<1x8x8xbf16>
    "tpu.trace_start"() <{level = 10 : i32, message = "bqk,bkd->bqd"}> : () -> ()
    %cst_21 = arith.constant dense<0.000000e+00> : vector<1x8x8xf32>
    %73 = tpu.matmul %72, %60, %cst_21 {dimension_numbers = #tpu.dot_dimension_numbers<[2], [1], [1], [2], [0, 0, 0, 1, 1, 2], [0], [0]>} : vector<1x8x8xbf16>, vector<1x8x8xbf16>, vector<1x8x8xf32> -> vector<1x8x8xf32>
    "tpu.trace_stop"() : () -> ()
    %74 = vector.shape_cast %73 : vector<1x8x8xf32> to vector<8x8xf32>
    %75 = vector.extract_strided_slice %28 {offsets = [0, 16], sizes = [8, 8], strides = [1, 1]} : vector<8x96xf32> to vector<8x8xf32>
    %76 = vector.shape_cast %75 : vector<8x8xf32> to vector<1x8x8xf32>
    %77 = arith.truncf %76 : vector<1x8x8xf32> to vector<1x8x8xbf16>
    %78 = vector.extract_strided_slice %28 {offsets = [0, 48], sizes = [8, 8], strides = [1, 1]} : vector<8x96xf32> to vector<8x8xf32>
    %79 = vector.shape_cast %78 : vector<8x8xf32> to vector<1x8x8xf32>
    %80 = arith.truncf %79 : vector<1x8x8xf32> to vector<1x8x8xbf16>
    %81 = vector.extract_strided_slice %28 {offsets = [0, 80], sizes = [8, 8], strides = [1, 1]} : vector<8x96xf32> to vector<8x8xf32>
    %82 = vector.shape_cast %81 : vector<8x8xf32> to vector<1x8x8xf32>
    %83 = arith.truncf %82 : vector<1x8x8xf32> to vector<1x8x8xbf16>
    "tpu.trace_start"() <{level = 10 : i32, message = "bqd,bkd->bqk"}> : () -> ()
    %cst_22 = arith.constant dense<0.000000e+00> : vector<1x8x8xf32>
    %84 = tpu.matmul %77, %80, %cst_22 {dimension_numbers = #tpu.dot_dimension_numbers<[2], [2], [1], [1], [0, 0, 0, 1, 1, 1], [0], [0]>} : vector<1x8x8xbf16>, vector<1x8x8xbf16>, vector<1x8x8xf32> -> vector<1x8x8xf32>
    "tpu.trace_stop"() : () -> ()
    %cst_23 = arith.constant dense<0xFF800000> : vector<1x8xf32>
    %85 = vector.multi_reduction <maximumf>, %84, %cst_23 [2] : vector<1x8x8xf32> to vector<1x8xf32>
    %86 = vector.shape_cast %85 : vector<1x8xf32> to vector<1x8x1xf32>
    %87 = vector.broadcast %86 : vector<1x8x1xf32> to vector<1x8x8xf32>
    %88 = arith.subf %84, %87 : vector<1x8x8xf32>
    %89 = math.exp %88 : vector<1x8x8xf32>
    %cst_24 = arith.constant dense<0.000000e+00> : vector<1x8xf32>
    %90 = vector.multi_reduction <add>, %89, %cst_24 [2] : vector<1x8x8xf32> to vector<1x8xf32>
    %91 = vector.shape_cast %90 : vector<1x8xf32> to vector<1x8x1xf32>
    %92 = tpu.reciprocal %91 {approx = true} : vector<1x8x1xf32> -> vector<1x8x1xf32>
    %93 = vector.broadcast %92 : vector<1x8x1xf32> to vector<1x8x8xf32>
    %94 = arith.mulf %89, %93 : vector<1x8x8xf32>
    %95 = arith.truncf %94 : vector<1x8x8xf32> to vector<1x8x8xbf16>
    "tpu.trace_start"() <{level = 10 : i32, message = "bqk,bkd->bqd"}> : () -> ()
    %cst_25 = arith.constant dense<0.000000e+00> : vector<1x8x8xf32>
    %96 = tpu.matmul %95, %83, %cst_25 {dimension_numbers = #tpu.dot_dimension_numbers<[2], [1], [1], [2], [0, 0, 0, 1, 1, 2], [0], [0]>} : vector<1x8x8xbf16>, vector<1x8x8xbf16>, vector<1x8x8xf32> -> vector<1x8x8xf32>
    "tpu.trace_stop"() : () -> ()
    %97 = vector.shape_cast %96 : vector<1x8x8xf32> to vector<8x8xf32>
    %98 = vector.extract_strided_slice %28 {offsets = [0, 24], sizes = [8, 8], strides = [1, 1]} : vector<8x96xf32> to vector<8x8xf32>
    %99 = vector.shape_cast %98 : vector<8x8xf32> to vector<1x8x8xf32>
    %100 = arith.truncf %99 : vector<1x8x8xf32> to vector<1x8x8xbf16>
    %101 = vector.extract_strided_slice %28 {offsets = [0, 56], sizes = [8, 8], strides = [1, 1]} : vector<8x96xf32> to vector<8x8xf32>
    %102 = vector.shape_cast %101 : vector<8x8xf32> to vector<1x8x8xf32>
    %103 = arith.truncf %102 : vector<1x8x8xf32> to vector<1x8x8xbf16>
    %104 = vector.extract_strided_slice %28 {offsets = [0, 88], sizes = [8, 8], strides = [1, 1]} : vector<8x96xf32> to vector<8x8xf32>
    %105 = vector.shape_cast %104 : vector<8x8xf32> to vector<1x8x8xf32>
    %106 = arith.truncf %105 : vector<1x8x8xf32> to vector<1x8x8xbf16>
    "tpu.trace_start"() <{level = 10 : i32, message = "bqd,bkd->bqk"}> : () -> ()
    %cst_26 = arith.constant dense<0.000000e+00> : vector<1x8x8xf32>
    %107 = tpu.matmul %100, %103, %cst_26 {dimension_numbers = #tpu.dot_dimension_numbers<[2], [2], [1], [1], [0, 0, 0, 1, 1, 1], [0], [0]>} : vector<1x8x8xbf16>, vector<1x8x8xbf16>, vector<1x8x8xf32> -> vector<1x8x8xf32>
    "tpu.trace_stop"() : () -> ()
    %cst_27 = arith.constant dense<0xFF800000> : vector<1x8xf32>
    %108 = vector.multi_reduction <maximumf>, %107, %cst_27 [2] : vector<1x8x8xf32> to vector<1x8xf32>
    %109 = vector.shape_cast %108 : vector<1x8xf32> to vector<1x8x1xf32>
    %110 = vector.broadcast %109 : vector<1x8x1xf32> to vector<1x8x8xf32>
    %111 = arith.subf %107, %110 : vector<1x8x8xf32>
    %112 = math.exp %111 : vector<1x8x8xf32>
    %cst_28 = arith.constant dense<0.000000e+00> : vector<1x8xf32>
    %113 = vector.multi_reduction <add>, %112, %cst_28 [2] : vector<1x8x8xf32> to vector<1x8xf32>
    %114 = vector.shape_cast %113 : vector<1x8xf32> to vector<1x8x1xf32>
    %115 = tpu.reciprocal %114 {approx = true} : vector<1x8x1xf32> -> vector<1x8x1xf32>
    %116 = vector.broadcast %115 : vector<1x8x1xf32> to vector<1x8x8xf32>
    %117 = arith.mulf %112, %116 : vector<1x8x8xf32>
    %118 = arith.truncf %117 : vector<1x8x8xf32> to vector<1x8x8xbf16>
    "tpu.trace_start"() <{level = 10 : i32, message = "bqk,bkd->bqd"}> : () -> ()
    %cst_29 = arith.constant dense<0.000000e+00> : vector<1x8x8xf32>
    %119 = tpu.matmul %118, %106, %cst_29 {dimension_numbers = #tpu.dot_dimension_numbers<[2], [1], [1], [2], [0, 0, 0, 1, 1, 2], [0], [0]>} : vector<1x8x8xbf16>, vector<1x8x8xbf16>, vector<1x8x8xf32> -> vector<1x8x8xf32>
    "tpu.trace_stop"() : () -> ()
    %120 = vector.shape_cast %119 : vector<1x8x8xf32> to vector<8x8xf32>
    %121 = tpu.concatenate %51, %74, %97, %120 in 1 : vector<8x8xf32>, vector<8x8xf32>, vector<8x8xf32>, vector<8x8xf32> -> vector<8x32xf32>
    %122 = arith.truncf %121 : vector<8x32xf32> to vector<8x32xbf16>
    %c0_30 = arith.constant 0 : index
    %c0_31 = arith.constant 0 : index
    %c0_32 = arith.constant 0 : index
    %123 = vector.load %arg6[%c0_30, %c0_31, %c0_32] : memref<1x32x32xbf16, #tpu.memory_space<vmem>>, vector<1x32x32xbf16>
    %124 = vector.shape_cast %123 : vector<1x32x32xbf16> to vector<32x32xbf16>
    %cst_33 = arith.constant dense<0.000000e+00> : vector<8x32xf32>
    %125 = tpu.matmul %122, %124, %cst_33 {dimension_numbers = #tpu.dot_dimension_numbers<[1], [0], [0], [1], [0, 0, 1, 1], [], []>} : vector<8x32xbf16>, vector<32x32xbf16>, vector<8x32xf32> -> vector<8x32xf32>
    %c0_34 = arith.constant 0 : index
    %c0_35 = arith.constant 0 : index
    %c0_36 = arith.constant 0 : index
    %126 = vector.load %arg7[%c0_34, %c0_35, %c0_36] : memref<1x1x32xf32, #tpu.memory_space<vmem>>, vector<1x1x32xf32>
    %127 = vector.shape_cast %126 : vector<1x1x32xf32> to vector<1x32xf32>
    %128 = vector.broadcast %127 : vector<1x32xf32> to vector<8x32xf32>
    %129 = arith.addf %125, %128 : vector<8x32xf32>
    %130 = arith.addf %4, %129 : vector<8x32xf32>
    %cst_37 = arith.constant dense<0.000000e+00> : vector<8xf32>
    %131 = vector.multi_reduction <add>, %130, %cst_37 [1] : vector<8x32xf32> to vector<8xf32>
    %132 = vector.shape_cast %131 : vector<8xf32> to vector<8x1xf32>
    %cst_38 = arith.constant 3.200000e+01 : f32
    %133 = vector.broadcast %cst_38 : f32 to vector<8x1xf32>
    %134 = arith.divf %132, %133 : vector<8x1xf32>
    %135 = vector.broadcast %134 : vector<8x1xf32> to vector<8x32xf32>
    %136 = arith.subf %130, %135 : vector<8x32xf32>
    %137 = arith.mulf %136, %136 : vector<8x32xf32>
    %cst_39 = arith.constant dense<0.000000e+00> : vector<8xf32>
    %138 = vector.multi_reduction <add>, %137, %cst_39 [1] : vector<8x32xf32> to vector<8xf32>
    %139 = vector.shape_cast %138 : vector<8xf32> to vector<8x1xf32>
    %cst_40 = arith.constant 3.200000e+01 : f32
    %140 = vector.broadcast %cst_40 : f32 to vector<8x1xf32>
    %141 = arith.divf %139, %140 : vector<8x1xf32>
    %cst_41 = arith.constant 9.99999997E-7 : f32
    %142 = vector.broadcast %cst_41 : f32 to vector<8x1xf32>
    %143 = arith.addf %141, %142 : vector<8x1xf32>
    %144 = math.rsqrt %143 : vector<8x1xf32>
    %145 = vector.broadcast %144 : vector<8x1xf32> to vector<8x32xf32>
    %146 = arith.mulf %136, %145 : vector<8x32xf32>
    %147 = arith.truncf %146 : vector<8x32xf32> to vector<8x32xbf16>
    %c0_42 = arith.constant 0 : index
    %c0_43 = arith.constant 0 : index
    %c0_44 = arith.constant 0 : index
    %148 = vector.load %arg8[%c0_42, %c0_43, %c0_44] : memref<1x32x64xbf16, #tpu.memory_space<vmem>>, vector<1x32x64xbf16>
    %149 = vector.shape_cast %148 : vector<1x32x64xbf16> to vector<32x64xbf16>
    %cst_45 = arith.constant dense<0.000000e+00> : vector<8x64xf32>
    %150 = tpu.matmul %147, %149, %cst_45 {dimension_numbers = #tpu.dot_dimension_numbers<[1], [0], [0], [1], [0, 0, 1, 1], [], []>} : vector<8x32xbf16>, vector<32x64xbf16>, vector<8x64xf32> -> vector<8x64xf32>
    %c0_46 = arith.constant 0 : index
    %c0_47 = arith.constant 0 : index
    %c0_48 = arith.constant 0 : index
    %151 = vector.load %arg9[%c0_46, %c0_47, %c0_48] : memref<1x1x64xf32, #tpu.memory_space<vmem>>, vector<1x1x64xf32>
    %152 = vector.shape_cast %151 : vector<1x1x64xf32> to vector<1x64xf32>
    %153 = vector.broadcast %152 : vector<1x64xf32> to vector<8x64xf32>
    %154 = arith.addf %150, %153 : vector<8x64xf32>
    %155 = arith.mulf %154, %154 : vector<8x64xf32>
    %156 = arith.mulf %154, %155 : vector<8x64xf32>
    %cst_49 = arith.constant 4.471500e-02 : f32
    %157 = vector.broadcast %cst_49 : f32 to vector<8x64xf32>
    %158 = arith.mulf %157, %156 : vector<8x64xf32>
    %159 = arith.addf %154, %158 : vector<8x64xf32>
    %cst_50 = arith.constant 0.797884583 : f32
    %160 = vector.broadcast %cst_50 : f32 to vector<8x64xf32>
    %161 = arith.mulf %160, %159 : vector<8x64xf32>
    %162 = math.tanh %161 : vector<8x64xf32>
    %cst_51 = arith.constant 1.000000e+00 : f32
    %163 = vector.broadcast %cst_51 : f32 to vector<8x64xf32>
    %164 = arith.addf %163, %162 : vector<8x64xf32>
    %cst_52 = arith.constant 5.000000e-01 : f32
    %165 = vector.broadcast %cst_52 : f32 to vector<8x64xf32>
    %166 = arith.mulf %165, %164 : vector<8x64xf32>
    %167 = arith.mulf %154, %166 : vector<8x64xf32>
    %168 = arith.truncf %167 : vector<8x64xf32> to vector<8x64xbf16>
    %c0_53 = arith.constant 0 : index
    %c0_54 = arith.constant 0 : index
    %c0_55 = arith.constant 0 : index
    %169 = vector.load %arg10[%c0_53, %c0_54, %c0_55] : memref<1x64x32xbf16, #tpu.memory_space<vmem>>, vector<1x64x32xbf16>
    %170 = vector.shape_cast %169 : vector<1x64x32xbf16> to vector<64x32xbf16>
    %cst_56 = arith.constant dense<0.000000e+00> : vector<8x32xf32>
    %171 = tpu.matmul %168, %170, %cst_56 {dimension_numbers = #tpu.dot_dimension_numbers<[1], [0], [0], [1], [0, 0, 1, 1], [], []>} : vector<8x64xbf16>, vector<64x32xbf16>, vector<8x32xf32> -> vector<8x32xf32>
    %c0_57 = arith.constant 0 : index
    %c0_58 = arith.constant 0 : index
    %c0_59 = arith.constant 0 : index
    %172 = vector.load %arg11[%c0_57, %c0_58, %c0_59] : memref<1x1x32xf32, #tpu.memory_space<vmem>>, vector<1x1x32xf32>
    %173 = vector.shape_cast %172 : vector<1x1x32xf32> to vector<1x32xf32>
    %174 = vector.broadcast %173 : vector<1x32xf32> to vector<8x32xf32>
    %175 = arith.addf %171, %174 : vector<8x32xf32>
    %176 = arith.addf %130, %175 : vector<8x32xf32>
    %c1_i32 = arith.constant 1 : i32
    %177 = arith.cmpi slt, %arg1, %c1_i32 : i32
    %178 = arith.extui %177 : i1 to i32
    %c0_i32_60 = arith.constant 0 : i32
    %179 = arith.cmpi ne, %178, %c0_i32_60 : i32
    scf.if %179 {
      %183 = vector.shape_cast %176 : vector<8x32xf32> to vector<1x8x32xf32>
      %c0_63 = arith.constant 0 : index
      %c0_64 = arith.constant 0 : index
      %c0_65 = arith.constant 0 : index
      %184 = vector.load %arg14[%c0_63, %c0_64, %c0_65] : memref<1x8x32xf32, #tpu.memory_space<vmem>>, vector<1x8x32xf32>
      tpu.vector_store %arg14[%c0_63, %c0_64, %c0_65], %183 {strides = array<i32>} : memref<1x8x32xf32, #tpu.memory_space<vmem>>, vector<1x8x32xf32>,
    } else {
    }
    %c1_i32_61 = arith.constant 1 : i32
    %180 = arith.cmpi eq, %arg1, %c1_i32_61 : i32
    %181 = arith.extui %180 : i1 to i32
    %c0_i32_62 = arith.constant 0 : i32
    %182 = arith.cmpi ne, %181, %c0_i32_62 : i32
    scf.if %182 {
      %cst_63 = arith.constant dense<0.000000e+00> : vector<8xf32>
      %183 = vector.multi_reduction <add>, %176, %cst_63 [1] : vector<8x32xf32> to vector<8xf32>
      %184 = vector.shape_cast %183 : vector<8xf32> to vector<8x1xf32>
      %cst_64 = arith.constant 3.200000e+01 : f32
      %185 = vector.broadcast %cst_64 : f32 to vector<8x1xf32>
      %186 = arith.divf %184, %185 : vector<8x1xf32>
      %187 = vector.broadcast %186 : vector<8x1xf32> to vector<8x32xf32>
      %188 = arith.subf %176, %187 : vector<8x32xf32>
      %189 = arith.mulf %188, %188 : vector<8x32xf32>
      %cst_65 = arith.constant dense<0.000000e+00> : vector<8xf32>
      %190 = vector.multi_reduction <add>, %189, %cst_65 [1] : vector<8x32xf32> to vector<8xf32>
      %191 = vector.shape_cast %190 : vector<8xf32> to vector<8x1xf32>
      %cst_66 = arith.constant 3.200000e+01 : f32
      %192 = vector.broadcast %cst_66 : f32 to vector<8x1xf32>
      %193 = arith.divf %191, %192 : vector<8x1xf32>
      %cst_67 = arith.constant 9.99999997E-7 : f32
      %194 = vector.broadcast %cst_67 : f32 to vector<8x1xf32>
      %195 = arith.addf %193, %194 : vector<8x1xf32>
      %196 = math.rsqrt %195 : vector<8x1xf32>
      %197 = vector.broadcast %196 : vector<8x1xf32> to vector<8x32xf32>
      %198 = arith.mulf %188, %197 : vector<8x32xf32>
      %c0_68 = arith.constant 0 : index
      %c0_69 = arith.constant 0 : index
      %199 = vector.load %arg12[%c0_68, %c0_69] : memref<1x32xf32, #tpu.memory_space<vmem>>, vector<1x32xf32>
      %200 = vector.broadcast %199 : vector<1x32xf32> to vector<8x32xf32>
      %201 = arith.mulf %198, %200 : vector<8x32xf32>
      %c0_70 = arith.constant 0 : index
      %c0_71 = arith.constant 0 : index
      %202 = vector.load %arg13[%c0_70, %c0_71] : memref<1x32xf32, #tpu.memory_space<vmem>>, vector<1x32xf32>
      %203 = vector.broadcast %202 : vector<1x32xf32> to vector<8x32xf32>
      %204 = arith.addf %201, %203 : vector<8x32xf32>
      %205 = vector.shape_cast %204 : vector<8x32xf32> to vector<1x8x32xf32>
      %c0_72 = arith.constant 0 : index
      %c0_73 = arith.constant 0 : index
      %c0_74 = arith.constant 0 : index
      %206 = vector.load %arg14[%c0_72, %c0_73, %c0_74] : memref<1x8x32xf32, #tpu.memory_space<vmem>>, vector<1x8x32xf32>
      tpu.vector_store %arg14[%c0_72, %c0_73, %c0_74], %205 {strides = array<i32>} : memref<1x8x32xf32, #tpu.memory_space<vmem>>, vector<1x8x32xf32>,
    } else {
    }
    return
  }
  func.func @transform_0(%arg0: i32, %arg1: i32) -> (i32, i32, i32) {
    %c0_i32 = arith.constant 0 : i32
    %c0_i32_0 = arith.constant 0 : i32
    %c0_i32_1 = arith.constant 0 : i32
    return %arg0, %c0_i32, %c0_i32_0 : i32, i32, i32
  }
  func.func @transform_1(%arg0: i32, %arg1: i32) -> (i32, i32, i32) {
    %c0_i32 = arith.constant 0 : i32
    %c0_i32_0 = arith.constant 0 : i32
    %c0_i32_1 = arith.constant 0 : i32
    %c0_i32_2 = arith.constant 0 : i32
    return %c0_i32, %c0_i32_0, %c0_i32_1 : i32, i32, i32
  }
  func.func @transform_2(%arg0: i32, %arg1: i32) -> (i32, i32, i32) {
    %c0_i32 = arith.constant 0 : i32
    %c0_i32_0 = arith.constant 0 : i32
    %c0_i32_1 = arith.constant 0 : i32
    return %arg1, %c0_i32, %c0_i32_0 : i32, i32, i32
  }
  func.func @transform_3(%arg0: i32, %arg1: i32) -> (i32, i32, i32) {
    %c0_i32 = arith.constant 0 : i32
    %c0_i32_0 = arith.constant 0 : i32
    %c0_i32_1 = arith.constant 0 : i32
    return %arg1, %c0_i32, %c0_i32_0 : i32, i32, i32
  }
  func.func @transform_4(%arg0: i32, %arg1: i32) -> (i32, i32, i32) {
    %c0_i32 = arith.constant 0 : i32
    %c0_i32_0 = arith.constant 0 : i32
    %c0_i32_1 = arith.constant 0 : i32
    return %arg1, %c0_i32, %c0_i32_0 : i32, i32, i32
  }
  func.func @transform_5(%arg0: i32, %arg1: i32) -> (i32, i32, i32) {
    %c0_i32 = arith.constant 0 : i32
    %c0_i32_0 = arith.constant 0 : i32
    %c0_i32_1 = arith.constant 0 : i32
    return %arg1, %c0_i32, %c0_i32_0 : i32, i32, i32
  }
  func.func @transform_6(%arg0: i32, %arg1: i32) -> (i32, i32, i32) {
    %c0_i32 = arith.constant 0 : i32
    %c0_i32_0 = arith.constant 0 : i32
    %c0_i32_1 = arith.constant 0 : i32
    return %arg1, %c0_i32, %c0_i32_0 : i32, i32, i32
  }
  func.func @transform_7(%arg0: i32, %arg1: i32) -> (i32, i32, i32) {
    %c0_i32 = arith.constant 0 : i32
    %c0_i32_0 = arith.constant 0 : i32
    %c0_i32_1 = arith.constant 0 : i32
    return %arg1, %c0_i32, %c0_i32_0 : i32, i32, i32
  }
  func.func @transform_8(%arg0: i32, %arg1: i32) -> (i32, i32, i32) {
    %c0_i32 = arith.constant 0 : i32
    %c0_i32_0 = arith.constant 0 : i32
    %c0_i32_1 = arith.constant 0 : i32
    return %arg1, %c0_i32, %c0_i32_0 : i32, i32, i32
  }
  func.func @transform_9(%arg0: i32, %arg1: i32) -> (i32, i32, i32) {
    %c0_i32 = arith.constant 0 : i32
    %c0_i32_0 = arith.constant 0 : i32
    %c0_i32_1 = arith.constant 0 : i32
    return %arg1, %c0_i32, %c0_i32_0 : i32, i32, i32
  }
  func.func @transform_10(%arg0: i32, %arg1: i32) -> (i32, i32) {
    %c0_i32 = arith.constant 0 : i32
    %c0_i32_0 = arith.constant 0 : i32
    %c0_i32_1 = arith.constant 0 : i32
    return %c0_i32, %c0_i32_0 : i32, i32
  }
  func.func @transform_11(%arg0: i32, %arg1: i32) -> (i32, i32) {
    %c0_i32 = arith.constant 0 : i32
    %c0_i32_0 = arith.constant 0 : i32
    %c0_i32_1 = arith.constant 0 : i32
    return %c0_i32, %c0_i32_0 : i32, i32
  }
  func.func @transform_12(%arg0: i32, %arg1: i32) -> (i32, i32, i32) {
    %c0_i32 = arith.constant 0 : i32
    %c0_i32_0 = arith.constant 0 : i32
    %c0_i32_1 = arith.constant 0 : i32
    return %arg0, %c0_i32, %c0_i32_0 : i32, i32, i32
  }
}

</mosaic_0001>

<llo_original>
// kernel: tpu_custom_call.1
$region0: #{tpu_custom_call.1}
  #allocation0 [shape = 'u32[]', space=smem, size = 0x4, offset = 0x4, fixed_abs, tag = 'smem constant byte address 0x4 - core index']
  #allocation1 [shape = 'u32[144,128]{1,0:T(1,128)}', space=vmem, size = 0x12000, scoped, tag = 'internal scratch']
  %s0 = inlined_call_operand.hbm [shape: f32[2,8,32], index: 0, kind: input, shape index: {}]
  %s1 = inlined_call_operand.hbm [shape: f32[1,8,32], index: 1, kind: input, shape index: {}]
  %s2 = inlined_call_operand.vmem [shape: bf16[2,32,96], index: 2, kind: input, shape index: {}]
  %s3 = inlined_call_operand.vmem [shape: f32[2,1,96], index: 3, kind: input, shape index: {}]
  %s4 = inlined_call_operand.vmem [shape: bf16[2,32,32], index: 4, kind: input, shape index: {}]
  %s5 = inlined_call_operand.vmem [shape: f32[2,1,32], index: 5, kind: input, shape index: {}]
  %s6 = inlined_call_operand.vmem [shape: bf16[2,32,64], index: 6, kind: input, shape index: {}]
  %s7 = inlined_call_operand.vmem [shape: f32[2,1,64], index: 7, kind: input, shape index: {}]
  %s8 = inlined_call_operand.vmem [shape: bf16[2,64,32], index: 8, kind: input, shape index: {}]
  %s9 = inlined_call_operand.vmem [shape: f32[2,1,32], index: 9, kind: input, shape index: {}]
  %s10 = inlined_call_operand.vmem [shape: f32[1,32], index: 10, kind: input, shape index: {}]
  %s11 = inlined_call_operand.vmem [shape: f32[1,32], index: 11, kind: input, shape index: {}]
  %s12 = inlined_call_operand.hbm [shape: f32[2,8,32], index: 12, kind: output, shape index: {}]
  %s13 = sld [smem:[#allocation0]]
  $region101: #{tpu_custom_call.1} parent=0
    _
  %s15 = ssub.s32 1, %s13
  %s16 = scalar_select 0, %s15, %s13
  $region1: #{tpu_custom_call.1} parent=0
    #allocation2 [shape = 'u8[8192]{0}', space=vmem, size = 0x2000, scoped, tag = 'input window, operand 0']
    #allocation3 [shape = 's32[2]{0}', space=sflag, size = 0x8, scoped, tag = 'scoped memory for tpu_custom_call.1']
    #allocation4 [shape = 's32[2]{0}', space=sflag, size = 0x8, scoped, tag = 'scoped memory for tpu_custom_call.1']
    #allocation5 [shape = 'u8[4096]{0}', space=vmem, size = 0x1000, scoped, tag = 'input window, operand 1, single buffered']
    #allocation6 [shape = 's32[1]{0}', space=sflag, size = 0x4, scoped, tag = 'scoped memory for tpu_custom_call.1']
    #allocation7 [shape = 'u8[8192]{0}', space=vmem, size = 0x2000, scoped, tag = 'output window, operand 0']
    %17 = vsyncpa [#allocation3], 0
    %s18 = scalar_lea.sflag [#allocation3], 1
    %19 = vsyncpa %s18, 0
    %20 = vsyncpa [#allocation6], 0
    %21 = vsyncpa [#allocation4], 0
    %s22 = scalar_lea.sflag [#allocation4], 1
    %23 = vsyncpa %s22, 0
    loop: start=0, step=1, limit=6
    $region2: #{tpu_custom_call.1} parent=1 // loop_pre_header
      _
    $region3: #{tpu_custom_call.1} parent=1 // loop_header
      %s25 = sphi 0, %s29
      %p26 = scmp.ge.s32.totalorder %s25, 6
      %s32 = sphi 0, %s44
      %s33 = sphi 0, %s40
      %s34 = sphi 0, %s32
      %s35 = sphi 0, %s33
      %s36 = sphi 0, %s34
      %s37 = sphi 0, %s35
      %s47 = sphi 0, %s49
      %s50 = sphi 0, %s47
      %s51 = sphi 0, %s50
      %s67 = sphi 0, %s51
      %s71 = sphi 0, %s71
      %s73 = sphi 0, %s71
      %s74 = sphi 0, %s73
      %s88 = sphi 0, %s74
      %s94 = sphi 0, %s96
      %s97 = sphi 0, %s94
      %s98 = sphi 0, %s97
      %s114 = sphi 0, %s98
      %s120 = sphi 0, %s122
      %s123 = sphi 0, %s120
      %s124 = sphi 0, %s123
      %s140 = sphi 0, %s124
      %s146 = sphi 0, %s148
      %s149 = sphi 0, %s146
      %s150 = sphi 0, %s149
      %s166 = sphi 0, %s150
      %s172 = sphi 0, %s174
      %s175 = sphi 0, %s172
      %s176 = sphi 0, %s175
      %s192 = sphi 0, %s176
      %s198 = sphi 0, %s200
      %s201 = sphi 0, %s198
      %s202 = sphi 0, %s201
      %s218 = sphi 0, %s202
      %s224 = sphi 0, %s226
      %s227 = sphi 0, %s224
      %s228 = sphi 0, %s227
      %s244 = sphi 0, %s228
      %s250 = sphi 0, %s252
      %s253 = sphi 0, %s250
      %s254 = sphi 0, %s253
      %s270 = sphi 0, %s254
      %s276 = sphi 0, %s278
      %s279 = sphi 0, %s276
      %s280 = sphi 0, %s279
      %s296 = sphi 0, %s280
      %s300 = sphi 0, %s300
      %s302 = sphi 0, %s300
      %s303 = sphi 0, %s302
      %s317 = sphi 0, %s303
      %s321 = sphi 0, %s321
      %s323 = sphi 0, %s321
      %s324 = sphi 0, %s323
      %s338 = sphi 0, %s324
      %s344 = sphi 0, %s346
      %s347 = sphi 0, %s344
      %s348 = sphi 0, %s347
      %s364 = sphi 0, %s348
    $region4: #{tpu_custom_call.1} parent=1 // loop_header_branch
      %28 = sbr.rel (%p26) target = $region8
    $region5: #{tpu_custom_call.1} parent=1 // loop_body
      %s30 = ssub.s32 %s25, 1
      %s31 = ssub.s32 %s25, 2
      %s38 = sadd.s32 1, %s33
      %p39 = scmp.ge.s32.totalorder %s38, 2
      %s40 = scalar_select %p39, 0, %s38
      %s41 = sadd.s32 1, %s32
      %s42 = scalar_select %p39, %s41, %s32
      %p43 = scmp.ge.s32.totalorder %s42, 2
      %s44 = scalar_select %p43, 0, %s42
      %s45 = ssub.s32 %s32, %s44
      %p46 = scmp.eq.s32.totalorder %s45, 0
      %s48 = sadd.s32 %s47, 1
      %s49 = scalar_select %p46, %s47, %s48
      %p52 = pneg %p46
      %p53 = scmp.eq.s32.totalorder %s25, 3
      %p54 = por %p52, %p53
      %p55 = scmp.ne.s32.totalorder %s47, %s50
      %p56 = scmp.eq.s32.totalorder %s25, 0
      %p57 = por %p55, %p56
      %p58 = scmp.ne.s32.totalorder %s47, %s50
      %p59 = scmp.eq.s32.totalorder %s30, 3
      %p60 = por %p58, %p59
      %p61 = scmp.ne.s32.totalorder %s50, %s51
      %p62 = scmp.eq.s32.totalorder %s30, 0
      %p63 = por %p61, %p62
      %p64 = scmp.ne.s32.totalorder %s50, %s51
      %p65 = scmp.eq.s32.totalorder %s31, 3
      %p66 = por %p64, %p65
      %p68 = scmp.ne.s32.totalorder %s51, %s67
      %p69 = scmp.eq.s32.totalorder %s31, 0
      %p70 = por %p68, %p69
      %s72 = sadd.s32 %s71, 1
      %p75 = scmp.eq.s32.totalorder %s25, 3
      %p76 = scmp.ne.s32.totalorder %s71, %s73
      %p77 = scmp.eq.s32.totalorder %s25, 0
      %p78 = por %p76, %p77
      %p79 = scmp.ne.s32.totalorder %s71, %s73
      %p80 = scmp.eq.s32.totalorder %s30, 3
      %p81 = por %p79, %p80
      %p82 = scmp.ne.s32.totalorder %s73, %s74
      %p83 = scmp.eq.s32.totalorder %s30, 0
      %p84 = por %p82, %p83
      %p85 = scmp.ne.s32.totalorder %s73, %s74
      %p86 = scmp.eq.s32.totalorder %s31, 3
      %p87 = por %p85, %p86
      %p89 = scmp.ne.s32.totalorder %s74, %s88
      %p90 = scmp.eq.s32.totalorder %s31, 0
      %p91 = por %p89, %p90
      %s92 = ssub.s32 %s33, %s40
      %p93 = scmp.eq.s32.totalorder %s92, 0
      %s95 = sadd.s32 %s94, 1
      %s96 = scalar_select %p93, %s94, %s95
      %p99 = pneg %p93
      %p100 = scmp.eq.s32.totalorder %s25, 3
      %p101 = por %p99, %p100
      %p102 = scmp.ne.s32.totalorder %s94, %s97
      %p103 = scmp.eq.s32.totalorder %s25, 0
      %p104 = por %p102, %p103
      %p105 = scmp.ne.s32.totalorder %s94, %s97
      %p106 = scmp.eq.s32.totalorder %s30, 3
      %p107 = por %p105, %p106
      %p108 = scmp.ne.s32.totalorder %s97, %s98
      %p109 = scmp.eq.s32.totalorder %s30, 0
      %p110 = por %p108, %p109
      %p111 = scmp.ne.s32.totalorder %s97, %s98
      %p112 = scmp.eq.s32.totalorder %s31, 3
      %p113 = por %p111, %p112
      %p115 = scmp.ne.s32.totalorder %s98, %s114
      %p116 = scmp.eq.s32.totalorder %s31, 0
      %p117 = por %p115, %p116
      %s118 = ssub.s32 %s33, %s40
      %p119 = scmp.eq.s32.totalorder %s118, 0
      %s121 = sadd.s32 %s120, 1
      %s122 = scalar_select %p119, %s120, %s121
      %p125 = pneg %p119
      %p126 = scmp.eq.s32.totalorder %s25, 3
      %p127 = por %p125, %p126
      %p128 = scmp.ne.s32.totalorder %s120, %s123
      %p129 = scmp.eq.s32.totalorder %s25, 0
      %p130 = por %p128, %p129
      %p131 = scmp.ne.s32.totalorder %s120, %s123
      %p132 = scmp.eq.s32.totalorder %s30, 3
      %p133 = por %p131, %p132
      %p134 = scmp.ne.s32.totalorder %s123, %s124
      %p135 = scmp.eq.s32.totalorder %s30, 0
      %p136 = por %p134, %p135
      %p137 = scmp.ne.s32.totalorder %s123, %s124
      %p138 = scmp.eq.s32.totalorder %s31, 3
      %p139 = por %p137, %p138
      %p141 = scmp.ne.s32.totalorder %s124, %s140
      %p142 = scmp.eq.s32.totalorder %s31, 0
      %p143 = por %p141, %p142
      %s144 = ssub.s32 %s33, %s40
      %p145 = scmp.eq.s32.totalorder %s144, 0
      %s147 = sadd.s32 %s146, 1
      %s148 = scalar_select %p145, %s146, %s147
      %p151 = pneg %p145
      %p152 = scmp.eq.s32.totalorder %s25, 3
      %p153 = por %p151, %p152
      %p154 = scmp.ne.s32.totalorder %s146, %s149
      %p155 = scmp.eq.s32.totalorder %s25, 0
      %p156 = por %p154, %p155
      %p157 = scmp.ne.s32.totalorder %s146, %s149
      %p158 = scmp.eq.s32.totalorder %s30, 3
      %p159 = por %p157, %p158
      %p160 = scmp.ne.s32.totalorder %s149, %s150
      %p161 = scmp.eq.s32.totalorder %s30, 0
      %p162 = por %p160, %p161
      %p163 = scmp.ne.s32.totalorder %s149, %s150
      %p164 = scmp.eq.s32.totalorder %s31, 3
      %p165 = por %p163, %p164
      %p167 = scmp.ne.s32.totalorder %s150, %s166
      %p168 = scmp.eq.s32.totalorder %s31, 0
      %p169 = por %p167, %p168
      %s170 = ssub.s32 %s33, %s40
      %p171 = scmp.eq.s32.totalorder %s170, 0
      %s173 = sadd.s32 %s172, 1
      %s174 = scalar_select %p171, %s172, %s173
      %p177 = pneg %p171
      %p178 = scmp.eq.s32.totalorder %s25, 3
      %p179 = por %p177, %p178
      %p180 = scmp.ne.s32.totalorder %s172, %s175
      %p181 = scmp.eq.s32.totalorder %s25, 0
      %p182 = por %p180, %p181
      %p183 = scmp.ne.s32.totalorder %s172, %s175
      %p184 = scmp.eq.s32.totalorder %s30, 3
      %p185 = por %p183, %p184
      %p186 = scmp.ne.s32.totalorder %s175, %s176
      %p187 = scmp.eq.s32.totalorder %s30, 0
      %p188 = por %p186, %p187
      %p189 = scmp.ne.s32.totalorder %s175, %s176
      %p190 = scmp.eq.s32.totalorder %s31, 3
      %p191 = por %p189, %p190
      %p193 = scmp.ne.s32.totalorder %s176, %s192
      %p194 = scmp.eq.s32.totalorder %s31, 0
      %p195 = por %p193, %p194
      %s196 = ssub.s32 %s33, %s40
      %p197 = scmp.eq.s32.totalorder %s196, 0
      %s199 = sadd.s32 %s198, 1
      %s200 = scalar_select %p197, %s198, %s199
      %p203 = pneg %p197
      %p204 = scmp.eq.s32.totalorder %s25, 3
      %p205 = por %p203, %p204
      %p206 = scmp.ne.s32.totalorder %s198, %s201
      %p207 = scmp.eq.s32.totalorder %s25, 0
      %p208 = por %p206, %p207
      %p209 = scmp.ne.s32.totalorder %s198, %s201
      %p210 = scmp.eq.s32.totalorder %s30, 3
      %p211 = por %p209, %p210
      %p212 = scmp.ne.s32.totalorder %s201, %s202
      %p213 = scmp.eq.s32.totalorder %s30, 0
      %p214 = por %p212, %p213
      %p215 = scmp.ne.s32.totalorder %s201, %s202
      %p216 = scmp.eq.s32.totalorder %s31, 3
      %p217 = por %p215, %p216
      %p219 = scmp.ne.s32.totalorder %s202, %s218
      %p220 = scmp.eq.s32.totalorder %s31, 0
      %p221 = por %p219, %p220
      %s222 = ssub.s32 %s33, %s40
      %p223 = scmp.eq.s32.totalorder %s222, 0
      %s225 = sadd.s32 %s224, 1
      %s226 = scalar_select %p223, %s224, %s225
      %p229 = pneg %p223
      %p230 = scmp.eq.s32.totalorder %s25, 3
      %p231 = por %p229, %p230
      %p232 = scmp.ne.s32.totalorder %s224, %s227
      %p233 = scmp.eq.s32.totalorder %s25, 0
      %p234 = por %p232, %p233
      %p235 = scmp.ne.s32.totalorder %s224, %s227
      %p236 = scmp.eq.s32.totalorder %s30, 3
      %p237 = por %p235, %p236
      %p238 = scmp.ne.s32.totalorder %s227, %s228
      %p239 = scmp.eq.s32.totalorder %s30, 0
      %p240 = por %p238, %p239
      %p241 = scmp.ne.s32.totalorder %s227, %s228
      %p242 = scmp.eq.s32.totalorder %s31, 3
      %p243 = por %p241, %p242
      %p245 = scmp.ne.s32.totalorder %s228, %s244
      %p246 = scmp.eq.s32.totalorder %s31, 0
      %p247 = por %p245, %p246
      %s248 = ssub.s32 %s33, %s40
      %p249 = scmp.eq.s32.totalorder %s248, 0
      %s251 = sadd.s32 %s250, 1
      %s252 = scalar_select %p249, %s250, %s251
      %p255 = pneg %p249
      %p256 = scmp.eq.s32.totalorder %s25, 3
      %p257 = por %p255, %p256
      %p258 = scmp.ne.s32.totalorder %s250, %s253
      %p259 = scmp.eq.s32.totalorder %s25, 0
      %p260 = por %p258, %p259
      %p261 = scmp.ne.s32.totalorder %s250, %s253
      %p262 = scmp.eq.s32.totalorder %s30, 3
      %p263 = por %p261, %p262
      %p264 = scmp.ne.s32.totalorder %s253, %s254
      %p265 = scmp.eq.s32.totalorder %s30, 0
      %p266 = por %p264, %p265
      %p267 = scmp.ne.s32.totalorder %s253, %s254
      %p268 = scmp.eq.s32.totalorder %s31, 3
      %p269 = por %p267, %p268
      %p271 = scmp.ne.s32.totalorder %s254, %s270
      %p272 = scmp.eq.s32.totalorder %s31, 0
      %p273 = por %p271, %p272
      %s274 = ssub.s32 %s33, %s40
      %p275 = scmp.eq.s32.totalorder %s274, 0
      %s277 = sadd.s32 %s276, 1
      %s278 = scalar_select %p275, %s276, %s277
      %p281 = pneg %p275
      %p282 = scmp.eq.s32.totalorder %s25, 3
      %p283 = por %p281, %p282
      %p284 = scmp.ne.s32.totalorder %s276, %s279
      %p285 = scmp.eq.s32.totalorder %s25, 0
      %p286 = por %p284, %p285
      %p287 = scmp.ne.s32.totalorder %s276, %s279
      %p288 = scmp.eq.s32.totalorder %s30, 3
      %p289 = por %p287, %p288
      %p290 = scmp.ne.s32.totalorder %s279, %s280
      %p291 = scmp.eq.s32.totalorder %s30, 0
      %p292 = por %p290, %p291
      %p293 = scmp.ne.s32.totalorder %s279, %s280
      %p294 = scmp.eq.s32.totalorder %s31, 3
      %p295 = por %p293, %p294
      %p297 = scmp.ne.s32.totalorder %s280, %s296
      %p298 = scmp.eq.s32.totalorder %s31, 0
      %p299 = por %p297, %p298
      %s301 = sadd.s32 %s300, 1
      %p304 = scmp.eq.s32.totalorder %s25, 3
      %p305 = scmp.ne.s32.totalorder %s300, %s302
      %p306 = scmp.eq.s32.totalorder %s25, 0
      %p307 = por %p305, %p306
      %p308 = scmp.ne.s32.totalorder %s300, %s302
      %p309 = scmp.eq.s32.totalorder %s30, 3
      %p310 = por %p308, %p309
      %p311 = scmp.ne.s32.totalorder %s302, %s303
      %p312 = scmp.eq.s32.totalorder %s30, 0
      %p313 = por %p311, %p312
      %p314 = scmp.ne.s32.totalorder %s302, %s303
      %p315 = scmp.eq.s32.totalorder %s31, 3
      %p316 = por %p314, %p315
      %p318 = scmp.ne.s32.totalorder %s303, %s317
      %p319 = scmp.eq.s32.totalorder %s31, 0
      %p320 = por %p318, %p319
      %s322 = sadd.s32 %s321, 1
      %p325 = scmp.eq.s32.totalorder %s25, 3
      %p326 = scmp.ne.s32.totalorder %s321, %s323
      %p327 = scmp.eq.s32.totalorder %s25, 0
      %p328 = por %p326, %p327
      %p329 = scmp.ne.s32.totalorder %s321, %s323
      %p330 = scmp.eq.s32.totalorder %s30, 3
      %p331 = por %p329, %p330
      %p332 = scmp.ne.s32.totalorder %s323, %s324
      %p333 = scmp.eq.s32.totalorder %s30, 0
      %p334 = por %p332, %p333
      %p335 = scmp.ne.s32.totalorder %s323, %s324
      %p336 = scmp.eq.s32.totalorder %s31, 3
      %p337 = por %p335, %p336
      %p339 = scmp.ne.s32.totalorder %s324, %s338
      %p340 = scmp.eq.s32.totalorder %s31, 0
      %p341 = por %p339, %p340
      %s342 = ssub.s32 %s32, %s44
      %p343 = scmp.eq.s32.totalorder %s342, 0
      %s345 = sadd.s32 %s344, 1
      %s346 = scalar_select %p343, %s344, %s345
      %p349 = pneg %p343
      %p350 = scmp.eq.s32.totalorder %s25, 3
      %p351 = por %p349, %p350
      %p352 = scmp.ne.s32.totalorder %s344, %s347
      %p353 = scmp.eq.s32.totalorder %s25, 0
      %p354 = por %p352, %p353
      %p355 = scmp.ne.s32.totalorder %s344, %s347
      %p356 = scmp.eq.s32.totalorder %s30, 3
      %p357 = por %p355, %p356
      %p358 = scmp.ne.s32.totalorder %s347, %s348
      %p359 = scmp.eq.s32.totalorder %s30, 0
      %p360 = por %p358, %p359
      %p361 = scmp.ne.s32.totalorder %s347, %s348
      %p362 = scmp.eq.s32.totalorder %s31, 3
      %p363 = por %p361, %p362
      %p365 = scmp.ne.s32.totalorder %s348, %s364
      %p366 = scmp.eq.s32.totalorder %s31, 0
      %p367 = por %p365, %p366
      %p368 = scmp.le.s32.totalorder 1, %s25
      %p369 = scmp.lt.s32.totalorder %s25, 5
      %p370 = pnand %p368, %p369
      %p371 = pneg %p370
      // Predicated region
      $region9: #{tpu_custom_call.1} parent=5 // pred_check
        _
      $region10: #{tpu_custom_call.1} parent=5 // pred_check_branch
        %373 = sbr.rel (%p370) target = $region12
      $region11: #{tpu_custom_call.1} parent=5 // pred_region
        %s374 = ssub.s32 %s25, 1
        // Predicated region
        $region13: #{tpu_custom_call.1} parent=11 // pred_check
          %p375 = pneg %p84
        $region14: #{tpu_custom_call.1} parent=11 // pred_check_branch
          %377 = sbr.rel (%p375) target = $region16
        $region15: #{tpu_custom_call.1} parent=11 // pred_region
          %s379 = ssub.s32 128, 128
          %380 = vsyncadd [#allocation6], %s379
          %s382 = sshll.u32 [#allocation5], 4
          %s383 = int_to_ptr.vmem [resolvable:$true] %s382
          %385 = dma.hbm_to_vmem [thread:$0]  %s1, 128, %s383, [#allocation6]
        $region16: #{tpu_custom_call.1} parent=11 // pred_fallthru
          _
        // Predicated region
        $region17: #{tpu_custom_call.1} parent=11 // pred_check
          %p386 = pneg %p313
        $region18: #{tpu_custom_call.1} parent=11 // pred_check_branch
          %388 = sbr.rel (%p386) target = $region20
        $region19: #{tpu_custom_call.1} parent=11 // pred_region
          _
        $region20: #{tpu_custom_call.1} parent=11 // pred_fallthru
          _
        // Predicated region
        $region21: #{tpu_custom_call.1} parent=11 // pred_check
          %p389 = pneg %p334
        $region22: #{tpu_custom_call.1} parent=11 // pred_check_branch
          %391 = sbr.rel (%p389) target = $region24
        $region23: #{tpu_custom_call.1} parent=11 // pred_region
          _
        $region24: #{tpu_custom_call.1} parent=11 // pred_fallthru
          _
      $region12: #{tpu_custom_call.1} parent=5 // pred_fallthru
        _
      %p392 = scmp.lt.s32.totalorder %s25, 4
      // Predicated region
      $region25: #{tpu_custom_call.1} parent=5 // pred_check
        %p393 = pneg %p392
      $region26: #{tpu_custom_call.1} parent=5 // pred_check_branch
        %395 = sbr.rel (%p393) target = $region28
      $region27: #{tpu_custom_call.1} parent=5 // pred_region
        // Predicated region
        $region29: #{tpu_custom_call.1} parent=27 // pred_check
          %p396 = pneg %p57
        $region30: #{tpu_custom_call.1} parent=27 // pred_check_branch
          %398 = sbr.rel (%p396) target = $region32
        $region31: #{tpu_custom_call.1} parent=27 // pred_region
          %s399 = sand.u32 %s47, 1
          %s400 = scalar_lea.sflag [#allocation3], %s399
          %s401 = sand.u32 %s47, 1
          %s402 = smul.addr %s401, 8
          %s403 = scalar_lea.vmem [#allocation2], %s402
          %s405 = ssub.s32 128, 128
          %406 = vsyncadd %s400, %s405
          %s407 = smul.addr %s32, 128
          %s408 = scalar_lea.hbm %s0, %s407
          %s410 = sshll.u32 %s403, 4
          %s411 = int_to_ptr.vmem [resolvable:$true] %s410
          %413 = dma.hbm_to_vmem [thread:$0]  %s408, 128, %s411, %s400
        $region32: #{tpu_custom_call.1} parent=27 // pred_fallthru
          _
        // Predicated region
        $region33: #{tpu_custom_call.1} parent=27 // pred_check
          %p414 = pneg %p104
        $region34: #{tpu_custom_call.1} parent=27 // pred_check_branch
          %416 = sbr.rel (%p414) target = $region36
        $region35: #{tpu_custom_call.1} parent=27 // pred_region
          %p417 = scmp.lt.s32.totalorder %s33, 1
          %s418 = scalar_select %p417, %s33, 1
          %s419 = smul.addr %s418, 4
          %s420 = smul.addr %s419, 4
          %s421 = scalar_lea.vmem %s2, %s420
        $region36: #{tpu_custom_call.1} parent=27 // pred_fallthru
          _
        // Predicated region
        $region37: #{tpu_custom_call.1} parent=27 // pred_check
          %p422 = pneg %p130
        $region38: #{tpu_custom_call.1} parent=27 // pred_check_branch
          %424 = sbr.rel (%p422) target = $region40
        $region39: #{tpu_custom_call.1} parent=27 // pred_region
          %p425 = scmp.lt.s32.totalorder %s33, 1
          %s426 = scalar_select %p425, %s33, 1
          %s427 = scalar_lea.vmem %s3, %s426
        $region40: #{tpu_custom_call.1} parent=27 // pred_fallthru
          _
        // Predicated region
        $region41: #{tpu_custom_call.1} parent=27 // pred_check
          %p428 = pneg %p156
        $region42: #{tpu_custom_call.1} parent=27 // pred_check_branch
          %430 = sbr.rel (%p428) target = $region44
        $region43: #{tpu_custom_call.1} parent=27 // pred_region
          %p431 = scmp.lt.s32.totalorder %s33, 1
          %s432 = scalar_select %p431, %s33, 1
          %s433 = smul.addr %s432, 4
          %s434 = smul.addr %s433, 4
          %s435 = scalar_lea.vmem %s4, %s434
        $region44: #{tpu_custom_call.1} parent=27 // pred_fallthru
          _
        // Predicated region
        $region45: #{tpu_custom_call.1} parent=27 // pred_check
          %p436 = pneg %p182
        $region46: #{tpu_custom_call.1} parent=27 // pred_check_branch
          %438 = sbr.rel (%p436) target = $region48
        $region47: #{tpu_custom_call.1} parent=27 // pred_region
          %p439 = scmp.lt.s32.totalorder %s33, 1
          %s440 = scalar_select %p439, %s33, 1
          %s441 = scalar_lea.vmem %s5, %s440
        $region48: #{tpu_custom_call.1} parent=27 // pred_fallthru
          _
        // Predicated region
        $region49: #{tpu_custom_call.1} parent=27 // pred_check
          %p442 = pneg %p208
        $region50: #{tpu_custom_call.1} parent=27 // pred_check_branch
          %444 = sbr.rel (%p442) target = $region52
        $region51: #{tpu_custom_call.1} parent=27 // pred_region
          %p445 = scmp.lt.s32.totalorder %s33, 1
          %s446 = scalar_select %p445, %s33, 1
          %s447 = smul.addr %s446, 4
          %s448 = smul.addr %s447, 4
          %s449 = scalar_lea.vmem %s6, %s448
        $region52: #{tpu_custom_call.1} parent=27 // pred_fallthru
          _
        // Predicated region
        $region53: #{tpu_custom_call.1} parent=27 // pred_check
          %p450 = pneg %p234
        $region54: #{tpu_custom_call.1} parent=27 // pred_check_branch
          %452 = sbr.rel (%p450) target = $region56
        $region55: #{tpu_custom_call.1} parent=27 // pred_region
          %p453 = scmp.lt.s32.totalorder %s33, 1
          %s454 = scalar_select %p453, %s33, 1
          %s455 = scalar_lea.vmem %s7, %s454
        $region56: #{tpu_custom_call.1} parent=27 // pred_fallthru
          _
        // Predicated region
        $region57: #{tpu_custom_call.1} parent=27 // pred_check
          %p456 = pneg %p260
        $region58: #{tpu_custom_call.1} parent=27 // pred_check_branch
          %458 = sbr.rel (%p456) target = $region60
        $region59: #{tpu_custom_call.1} parent=27 // pred_region
          %p459 = scmp.lt.s32.totalorder %s33, 1
          %s460 = scalar_select %p459, %s33, 1
          %s461 = smul.addr %s460, 8
          %s462 = smul.addr %s461, 4
          %s463 = scalar_lea.vmem %s8, %s462
        $region60: #{tpu_custom_call.1} parent=27 // pred_fallthru
          _
        // Predicated region
        $region61: #{tpu_custom_call.1} parent=27 // pred_check
          %p464 = pneg %p286
        $region62: #{tpu_custom_call.1} parent=27 // pred_check_branch
          %466 = sbr.rel (%p464) target = $region64
        $region63: #{tpu_custom_call.1} parent=27 // pred_region
          %p467 = scmp.lt.s32.totalorder %s33, 1
          %s468 = scalar_select %p467, %s33, 1
          %s469 = scalar_lea.vmem %s9, %s468
        $region64: #{tpu_custom_call.1} parent=27 // pred_fallthru
          _
      $region28: #{tpu_custom_call.1} parent=5 // pred_fallthru
        _
      %p470 = scmp.le.s32.totalorder 1, %s25
      %p471 = scmp.lt.s32.totalorder %s25, 5
      %p472 = pnand %p470, %p471
      %p473 = pneg %p472
      // Predicated region
      $region65: #{tpu_custom_call.1} parent=5 // pred_check
        _
      $region66: #{tpu_custom_call.1} parent=5 // pred_check_branch
        %475 = sbr.rel (%p472) target = $region68
      $region67: #{tpu_custom_call.1} parent=5 // pred_region
        %s476 = ssub.s32 %s25, 1
        %s477 = sand.u32 %s50, 1
        %s478 = scalar_lea.sflag [#allocation3], %s477
        %s479 = sand.u32 %s50, 1
        %s480 = smul.addr %s479, 8
        %s481 = scalar_lea.vmem [#allocation2], %s480
        // Predicated region
        $region69: #{tpu_custom_call.1} parent=67 // pred_check
          %p482 = pneg %p63
        $region70: #{tpu_custom_call.1} parent=67 // pred_check_branch
          %484 = sbr.rel (%p482) target = $region72
        $region71: #{tpu_custom_call.1} parent=67 // pred_region
          %485 = dma.done %s478, 128
        $region72: #{tpu_custom_call.1} parent=67 // pred_fallthru
          _
        // Predicated region
        $region73: #{tpu_custom_call.1} parent=67 // pred_check
          %p486 = pneg %p84
        $region74: #{tpu_custom_call.1} parent=67 // pred_check_branch
          %488 = sbr.rel (%p486) target = $region76
        $region75: #{tpu_custom_call.1} parent=67 // pred_region
          %489 = dma.done [#allocation6], 128
        $region76: #{tpu_custom_call.1} parent=67 // pred_fallthru
          _
        %s490 = sand.u32 %s50, 1
        %s491 = scalar_lea.sflag [#allocation3], %s490
        %s492 = sand.u32 %s50, 1
        %s493 = smul.addr %s492, 8
        %s494 = scalar_lea.vmem [#allocation2], %s493
        %p495 = pneg %p63
        %p496 = pneg %p60
        %p497 = pneg %p84
        %p498 = pneg %p81
        %p499 = scmp.lt.s32.totalorder %s35, 1
        %s500 = scalar_select %p499, %s35, 1
        %s501 = smul.addr %s500, 4
        %s502 = smul.addr %s501, 4
        %s503 = scalar_lea.vmem %s2, %s502
        %p504 = pneg %p110
        %p505 = pneg %p107
        %p506 = scmp.lt.s32.totalorder %s35, 1
        %s507 = scalar_select %p506, %s35, 1
        %s508 = scalar_lea.vmem %s3, %s507
        %p509 = pneg %p136
        %p510 = pneg %p133
        %p511 = scmp.lt.s32.totalorder %s35, 1
        %s512 = scalar_select %p511, %s35, 1
        %s513 = smul.addr %s512, 4
        %s514 = smul.addr %s513, 4
        %s515 = scalar_lea.vmem %s4, %s514
        %p516 = pneg %p162
        %p517 = pneg %p159
        %p518 = scmp.lt.s32.totalorder %s35, 1
        %s519 = scalar_select %p518, %s35, 1
        %s520 = scalar_lea.vmem %s5, %s519
        %p521 = pneg %p188
        %p522 = pneg %p185
        %p523 = scmp.lt.s32.totalorder %s35, 1
        %s524 = scalar_select %p523, %s35, 1
        %s525 = smul.addr %s524, 4
        %s526 = smul.addr %s525, 4
        %s527 = scalar_lea.vmem %s6, %s526
        %p528 = pneg %p214
        %p529 = pneg %p211
        %p530 = scmp.lt.s32.totalorder %s35, 1
        %s531 = scalar_select %p530, %s35, 1
        %s532 = scalar_lea.vmem %s7, %s531
        %p533 = pneg %p240
        %p534 = pneg %p237
        %p535 = scmp.lt.s32.totalorder %s35, 1
        %s536 = scalar_select %p535, %s35, 1
        %s537 = smul.addr %s536, 8
        %s538 = smul.addr %s537, 4
        %s539 = scalar_lea.vmem %s8, %s538
        %p540 = pneg %p266
        %p541 = pneg %p263
        %p542 = scmp.lt.s32.totalorder %s35, 1
        %s543 = scalar_select %p542, %s35, 1
        %s544 = scalar_lea.vmem %s9, %s543
        %p545 = pneg %p292
        %p546 = pneg %p289
        %p547 = pneg %p313
        %p548 = pneg %p310
        %p549 = pneg %p334
        %p550 = pneg %p331
        %p551 = pneg %p360
        %p552 = pneg %p357
        %s553 = sand.u32 %s347, 1
        %s554 = scalar_lea.sflag [#allocation4], %s553
        %s555 = sand.u32 %s347, 1
        %s556 = smul.addr %s555, 8
        %s557 = scalar_lea.vmem [#allocation7], %s556
        %p558 = scmp.lt.s32.totalorder %s35, 1
        %s559 = scalar_select %p558, %s35, 1
        %s560 = smul.addr %s559, 4
        %s561 = smul.addr %s560, 4
        %s562 = scalar_lea.vmem %s2, %s561
        %p563 = scmp.lt.s32.totalorder %s35, 1
        %s564 = scalar_select %p563, %s35, 1
        %s565 = scalar_lea.vmem %s3, %s564
        %p566 = scmp.lt.s32.totalorder %s35, 1
        %s567 = scalar_select %p566, %s35, 1
        %s568 = smul.addr %s567, 4
        %s569 = smul.addr %s568, 4
        %s570 = scalar_lea.vmem %s4, %s569
        %p571 = scmp.lt.s32.totalorder %s35, 1
        %s572 = scalar_select %p571, %s35, 1
        %s573 = scalar_lea.vmem %s5, %s572
        %p574 = scmp.lt.s32.totalorder %s35, 1
        %s575 = scalar_select %p574, %s35, 1
        %s576 = smul.addr %s575, 4
        %s577 = smul.addr %s576, 4
        %s578 = scalar_lea.vmem %s6, %s577
        %p579 = scmp.lt.s32.totalorder %s35, 1
        %s580 = scalar_select %p579, %s35, 1
        %s581 = scalar_lea.vmem %s7, %s580
        %p582 = scmp.lt.s32.totalorder %s35, 1
        %s583 = scalar_select %p582, %s35, 1
        %s584 = smul.addr %s583, 8
        %s585 = smul.addr %s584, 4
        %s586 = scalar_lea.vmem %s8, %s585
        %p587 = scmp.lt.s32.totalorder %s35, 1
        %s588 = scalar_select %p587, %s35, 1
        %s589 = scalar_lea.vmem %s9, %s588
        %p591 = scmp.eq.s32.totalorder %s35, 0
        // Predicated region
        $region77: #{tpu_custom_call.1} parent=67 // pred_check
          %p592 = pneg %p591
        $region78: #{tpu_custom_call.1} parent=67 // pred_check_branch
          %594 = sbr.rel (%p592) target = $region80
        $region79: #{tpu_custom_call.1} parent=67 // pred_region
          %v595 = vld [vmem:[%s481] sm:$0xff]
          %v596 = vld [vmem:[#allocation5] sm:$0xff]
          %v597 = vadd.f32 %v595, %v596
          %vm598 = vcmask 261120
          %599 = vst.msk [vmem:[%s557] sm:$0xff] %vm598, %v597
        $region80: #{tpu_custom_call.1} parent=67 // pred_fallthru
          _
        %v600 = vld [vmem:[%s557] sm:$0xff]
        %vm601 = vcmask 261120
        %v602 = vsel %vm601, %v600, 0.0
        %603 = vadd.xlane.f32.xlu0 %v602
        %v604 = vpop.xlane.xlu0 %603
        %v605 = vrcp.pop 32.0
        %v606 = vmul.f32 %v604, %v605
        %v607 = vsub.f32 %v600, %v606
        %v608 = vmul.f32 %v607, %v607
        %v609 = vsel %vm601, %v608, 0.0
        %610 = vadd.xlane.f32.xlu0 %v609
        %v611 = vpop.xlane.xlu0 %610
        %v612 = vmul.f32 %v611, %v605
        %v613 = vadd.f32 %v612, 1e-06
        %v614 = vrsqrt.pop %v613
        %v615 = vmul.f32 %v607, %v614
        %v616 = vpack.c.bf16 %v615, %v615
        %v617 = vld [vmem:[%s562] sm:$0xf]
        %v618 = vld [vmem:[%s562 + $0x4] sm:$0xf]
        %v619 = vld [vmem:[%s562 + $0x8] sm:$0xf]
        %v620 = vld [vmem:[%s562 + $0xc] sm:$0xf]
        %v621 = vld [vmem:[%s565] sm:$0x1]
        %v623 = vlaneseq
        %v624 = vshrl.u32 %v623, 7
        %v625 = vsub.s32 0, %v624
        %v626 = vrot.slane %v621, %v625
        %v632 = vunpack.c.l.b16 %v617
        %v633 = vunpack.c.l.b16 %v618
        %v634 = vunpack.c.l.b16 %v619
        %v635 = vunpack.c.l.b16 %v620
        %v636 = vpack.c.b16 %v633, %v632
        %v637 = vpack.c.b16 %v635, %v634
        %v641 = vsel %vm601, %v616, 0
        %643 = vmatprep.subr.bf16.mxu0 0
        %644 = vmatpush1.bf16.msra.mxu0 %v636
        %645 = vmatprep.subr.bf16.mxu0 0
        %646 = vmatpush1.bf16.msra.mxu0 %v637
        %647 = vmatprep.subr.bf16.mxu0 0
        %648 = vmatpush1.bf16.msra.mxu0 0
        %649 = vmatprep.subr.bf16.mxu0 0
        %650 = vmatpush1.bf16.msra.mxu0 0
        %651 = vmatprep.subr.bf16.mxu0 0
        %652 = vmatpush1.bf16.msra.mxu0 0
        %653 = vmatprep.subr.bf16.mxu0 0
        %654 = vmatpush1.bf16.msra.mxu0 0
        %655 = vmatprep.subr.bf16.mxu0 0
        %656 = vmatpush1.bf16.msra.mxu0 0
        %657 = vmatprep.subr.bf16.mxu0 0
        %658 = vmatpush1.bf16.msra.mxu0 0
        %659 = vmatprep.subr.bf16.mxu0 0
        %660 = vmatpush1.bf16.msra.mxu0 0
        %661 = vmatprep.subr.bf16.mxu0 0
        %662 = vmatpush1.bf16.msra.mxu0 0
        %663 = vmatprep.subr.bf16.mxu0 0
        %664 = vmatpush1.bf16.msra.mxu0 0
        %665 = vmatprep.subr.bf16.mxu0 0
        %666 = vmatpush1.bf16.msra.mxu0 0
        %667 = vmatprep.subr.bf16.mxu0 0
        %668 = vmatpush1.bf16.msra.mxu0 0
        %669 = vmatprep.subr.bf16.mxu0 0
        %670 = vmatpush1.bf16.msra.mxu0 0
        %671 = vmatprep.subr.bf16.mxu0 0
        %672 = vmatpush1.bf16.msra.mxu0 0
        %673 = vmatprep.subr.bf16.mxu0 0
        %674 = vmatpush1.bf16.msra.mxu0 0
        %675 = vmatprep.mubr.bf16.mxu0 0
        %676 = vmatmul.mubr.bf16.gmra.mrb[0].mxu0 %v641
        %v677 = vpop.f32.mrb[0].mxu0
        %v678 = vadd.f32 %v626, %v677
        %v679 = vpop.f32.mrb[0].mxu0
        %v680 = vpop.f32.mrb[0].mxu0
        %v681 = vpop.f32.mrb[0].mxu0
        %682 = vdwg.mxu0
        %v683 = vpack.c.bf16 %v678, %v678
        %685 = vrot.lane.b32.xlu0 %v683, 96
        %v686 = vpop.permute.xlu0 %685
        %vm687 = vcmask 64512
        %v689 = vsel %vm687, %v683, 0
        %v692 = vsel %vm687, %v686, 0
        %694 = vmatprep.subr.bf16.mxu0 0
        %695 = vmatpush1.bf16.xpose.msra.mxu0 %v692
        %696 = vmatprep.subr.bf16.mxu0 0
        %697 = vmatpush1.bf16.xpose.msra.mxu0 0
        %698 = vmatprep.subr.bf16.mxu0 0
        %699 = vmatpush1.bf16.xpose.msra.mxu0 0
        %700 = vmatprep.subr.bf16.mxu0 0
        %701 = vmatpush1.bf16.xpose.msra.mxu0 0
        %702 = vmatprep.subr.bf16.mxu0 0
        %703 = vmatpush1.bf16.xpose.msra.mxu0 0
        %704 = vmatprep.subr.bf16.mxu0 0
        %705 = vmatpush1.bf16.xpose.msra.mxu0 0
        %706 = vmatprep.subr.bf16.mxu0 0
        %707 = vmatpush1.bf16.xpose.msra.mxu0 0
        %708 = vmatprep.subr.bf16.mxu0 0
        %709 = vmatpush1.bf16.xpose.msra.mxu0 0
        %710 = vmatprep.subr.bf16.mxu0 0
        %711 = vmatpush1.bf16.xpose.msra.mxu0 0
        %712 = vmatprep.subr.bf16.mxu0 0
        %713 = vmatpush1.bf16.xpose.msra.mxu0 0
        %714 = vmatprep.subr.bf16.mxu0 0
        %715 = vmatpush1.bf16.xpose.msra.mxu0 0
        %716 = vmatprep.subr.bf16.mxu0 0
        %717 = vmatpush1.bf16.xpose.msra.mxu0 0
        %718 = vmatprep.subr.bf16.mxu0 0
        %719 = vmatpush1.bf16.xpose.msra.mxu0 0
        %720 = vmatprep.subr.bf16.mxu0 0
        %721 = vmatpush1.bf16.xpose.msra.mxu0 0
        %722 = vmatprep.subr.bf16.mxu0 0
        %723 = vmatpush1.bf16.xpose.msra.mxu0 0
        %724 = vmatprep.subr.bf16.mxu0 0
        %725 = vmatpush1.bf16.xpose.msra.mxu0 0
        %726 = vmatprep.mubr.bf16.mxu0 0
        %727 = vmatmul.mubr.bf16.gmra.mrb[0].mxu0 %v689
        %v728 = vpop.f32.mrb[0].mxu0
        %v729 = vadd.f32 0.0, %v728
        %v730 = vpop.f32.mrb[0].mxu0
        %v731 = vpop.f32.mrb[0].mxu0
        %v732 = vpop.f32.mrb[0].mxu0
        %733 = vdwg.mxu0
        %v734 = vsel %vm687, %v729, -inf
        %735 = vmax.xlane.f32.xlu0 %v734
        %v736 = vpop.xlane.xlu0 %735
        %v737 = vsub.f32 %v729, %v736
        %v738 = vmul.f32 %v737, 1.442695
        %v739 = vpow.pop %v738
        %v740 = vsel %vm687, %v739, 0.0
        %741 = vadd.xlane.f32.xlu0 %v740
        %v742 = vpop.xlane.xlu0 %741
        %v743 = vrcp.pop %v742
        %v744 = vmul.f32 %v739, %v743
        %v745 = vpack.c.bf16 %v744, %v744
        %746 = vrot.lane.b32.xlu0 %v683, 64
        %v747 = vpop.permute.xlu0 %746
        %v749 = vsel %vm687, %v745, 0
        %vm751 = vcmask 1043456
        %v753 = vsel %vm751, %v747, 0
        %755 = vmatprep.subr.bf16.mxu0 0
        %756 = vmatpush1.bf16.msra.mxu0 %v753
        %757 = vmatprep.subr.bf16.mxu0 0
        %758 = vmatpush1.bf16.msra.mxu0 0
        %759 = vmatprep.subr.bf16.mxu0 0
        %760 = vmatpush1.bf16.msra.mxu0 0
        %761 = vmatprep.subr.bf16.mxu0 0
        %762 = vmatpush1.bf16.msra.mxu0 0
        %763 = vmatprep.subr.bf16.mxu0 0
        %764 = vmatpush1.bf16.msra.mxu0 0
        %765 = vmatprep.subr.bf16.mxu0 0
        %766 = vmatpush1.bf16.msra.mxu0 0
        %767 = vmatprep.subr.bf16.mxu0 0
        %768 = vmatpush1.bf16.msra.mxu0 0
        %769 = vmatprep.subr.bf16.mxu0 0
        %770 = vmatpush1.bf16.msra.mxu0 0
        %771 = vmatprep.subr.bf16.mxu0 0
        %772 = vmatpush1.bf16.msra.mxu0 0
        %773 = vmatprep.subr.bf16.mxu0 0
        %774 = vmatpush1.bf16.msra.mxu0 0
        %775 = vmatprep.subr.bf16.mxu0 0
        %776 = vmatpush1.bf16.msra.mxu0 0
        %777 = vmatprep.subr.bf16.mxu0 0
        %778 = vmatpush1.bf16.msra.mxu0 0
        %779 = vmatprep.subr.bf16.mxu0 0
        %780 = vmatpush1.bf16.msra.mxu0 0
        %781 = vmatprep.subr.bf16.mxu0 0
        %782 = vmatpush1.bf16.msra.mxu0 0
        %783 = vmatprep.subr.bf16.mxu0 0
        %784 = vmatpush1.bf16.msra.mxu0 0
        %785 = vmatprep.subr.bf16.mxu0 0
        %786 = vmatpush1.bf16.msra.mxu0 0
        %787 = vmatprep.mubr.bf16.mxu0 0
        %788 = vmatmul.mubr.bf16.gmra.mrb[0].mxu0 %v749
        %v789 = vpop.f32.mrb[0].mxu0
        %v790 = vadd.f32 0.0, %v789
        %v791 = vpop.f32.mrb[0].mxu0
        %v792 = vpop.f32.mrb[0].mxu0
        %v793 = vpop.f32.mrb[0].mxu0
        %794 = vdwg.mxu0
        %795 = vrot.lane.b32.xlu0 %v683, 120
        %v796 = vpop.permute.xlu0 %795
        %797 = vrot.lane.b32.xlu0 %v683, 88
        %v798 = vpop.permute.xlu0 %797
        %v800 = vsel %vm687, %v796, 0
        %v803 = vsel %vm687, %v798, 0
        %805 = vmatprep.subr.bf16.mxu0 0
        %806 = vmatpush1.bf16.xpose.msra.mxu0 %v803
        %807 = vmatprep.subr.bf16.mxu0 0
        %808 = vmatpush1.bf16.xpose.msra.mxu0 0
        %809 = vmatprep.subr.bf16.mxu0 0
        %810 = vmatpush1.bf16.xpose.msra.mxu0 0
        %811 = vmatprep.subr.bf16.mxu0 0
        %812 = vmatpush1.bf16.xpose.msra.mxu0 0
        %813 = vmatprep.subr.bf16.mxu0 0
        %814 = vmatpush1.bf16.xpose.msra.mxu0 0
        %815 = vmatprep.subr.bf16.mxu0 0
        %816 = vmatpush1.bf16.xpose.msra.mxu0 0
        %817 = vmatprep.subr.bf16.mxu0 0
        %818 = vmatpush1.bf16.xpose.msra.mxu0 0
        %819 = vmatprep.subr.bf16.mxu0 0
        %820 = vmatpush1.bf16.xpose.msra.mxu0 0
        %821 = vmatprep.subr.bf16.mxu0 0
        %822 = vmatpush1.bf16.xpose.msra.mxu0 0
        %823 = vmatprep.subr.bf16.mxu0 0
        %824 = vmatpush1.bf16.xpose.msra.mxu0 0
        %825 = vmatprep.subr.bf16.mxu0 0
        %826 = vmatpush1.bf16.xpose.msra.mxu0 0
        %827 = vmatprep.subr.bf16.mxu0 0
        %828 = vmatpush1.bf16.xpose.msra.mxu0 0
        %829 = vmatprep.subr.bf16.mxu0 0
        %830 = vmatpush1.bf16.xpose.msra.mxu0 0
        %831 = vmatprep.subr.bf16.mxu0 0
        %832 = vmatpush1.bf16.xpose.msra.mxu0 0
        %833 = vmatprep.subr.bf16.mxu0 0
        %834 = vmatpush1.bf16.xpose.msra.mxu0 0
        %835 = vmatprep.subr.bf16.mxu0 0
        %836 = vmatpush1.bf16.xpose.msra.mxu0 0
        %837 = vmatprep.mubr.bf16.mxu0 0
        %838 = vmatmul.mubr.bf16.gmra.mrb[0].mxu0 %v800
        %v839 = vpop.f32.mrb[0].mxu0
        %v840 = vadd.f32 0.0, %v839
        %v841 = vpop.f32.mrb[0].mxu0
        %v842 = vpop.f32.mrb[0].mxu0
        %v843 = vpop.f32.mrb[0].mxu0
        %844 = vdwg.mxu0
        %v845 = vsel %vm687, %v840, -inf
        %846 = vmax.xlane.f32.xlu0 %v845
        %v847 = vpop.xlane.xlu0 %846
        %v848 = vsub.f32 %v840, %v847
        %v849 = vmul.f32 %v848, 1.442695
        %v850 = vpow.pop %v849
        %v851 = vsel %vm687, %v850, 0.0
        %852 = vadd.xlane.f32.xlu0 %v851
        %v853 = vpop.xlane.xlu0 %852
        %v854 = vrcp.pop %v853
        %v855 = vmul.f32 %v850, %v854
        %v856 = vpack.c.bf16 %v855, %v855
        %857 = vrot.lane.b32.xlu0 %v683, 56
        %v858 = vpop.permute.xlu0 %857
        %v860 = vsel %vm687, %v856, 0
        %v863 = vsel %vm751, %v858, 0
        %865 = vmatprep.subr.bf16.mxu0 0
        %866 = vmatpush1.bf16.msra.mxu0 %v863
        %867 = vmatprep.subr.bf16.mxu0 0
        %868 = vmatpush1.bf16.msra.mxu0 0
        %869 = vmatprep.subr.bf16.mxu0 0
        %870 = vmatpush1.bf16.msra.mxu0 0
        %871 = vmatprep.subr.bf16.mxu0 0
        %872 = vmatpush1.bf16.msra.mxu0 0
        %873 = vmatprep.subr.bf16.mxu0 0
        %874 = vmatpush1.bf16.msra.mxu0 0
        %875 = vmatprep.subr.bf16.mxu0 0
        %876 = vmatpush1.bf16.msra.mxu0 0
        %877 = vmatprep.subr.bf16.mxu0 0
        %878 = vmatpush1.bf16.msra.mxu0 0
        %879 = vmatprep.subr.bf16.mxu0 0
        %880 = vmatpush1.bf16.msra.mxu0 0
        %881 = vmatprep.subr.bf16.mxu0 0
        %882 = vmatpush1.bf16.msra.mxu0 0
        %883 = vmatprep.subr.bf16.mxu0 0
        %884 = vmatpush1.bf16.msra.mxu0 0
        %885 = vmatprep.subr.bf16.mxu0 0
        %886 = vmatpush1.bf16.msra.mxu0 0
        %887 = vmatprep.subr.bf16.mxu0 0
        %888 = vmatpush1.bf16.msra.mxu0 0
        %889 = vmatprep.subr.bf16.mxu0 0
        %890 = vmatpush1.bf16.msra.mxu0 0
        %891 = vmatprep.subr.bf16.mxu0 0
        %892 = vmatpush1.bf16.msra.mxu0 0
        %893 = vmatprep.subr.bf16.mxu0 0
        %894 = vmatpush1.bf16.msra.mxu0 0
        %895 = vmatprep.subr.bf16.mxu0 0
        %896 = vmatpush1.bf16.msra.mxu0 0
        %897 = vmatprep.mubr.bf16.mxu0 0
        %898 = vmatmul.mubr.bf16.gmra.mrb[0].mxu0 %v860
        %v899 = vpop.f32.mrb[0].mxu0
        %v900 = vadd.f32 0.0, %v899
        %v901 = vpop.f32.mrb[0].mxu0
        %v902 = vpop.f32.mrb[0].mxu0
        %v903 = vpop.f32.mrb[0].mxu0
        %904 = vdwg.mxu0
        %905 = vrot.lane.b32.xlu0 %v683, 112
        %v906 = vpop.permute.xlu0 %905
        %907 = vrot.lane.b32.xlu0 %v683, 80
        %v908 = vpop.permute.xlu0 %907
        %v910 = vsel %vm687, %v906, 0
        %v913 = vsel %vm687, %v908, 0
        %915 = vmatprep.subr.bf16.mxu0 0
        %916 = vmatpush1.bf16.xpose.msra.mxu0 %v913
        %917 = vmatprep.subr.bf16.mxu0 0
        %918 = vmatpush1.bf16.xpose.msra.mxu0 0
        %919 = vmatprep.subr.bf16.mxu0 0
        %920 = vmatpush1.bf16.xpose.msra.mxu0 0
        %921 = vmatprep.subr.bf16.mxu0 0
        %922 = vmatpush1.bf16.xpose.msra.mxu0 0
        %923 = vmatprep.subr.bf16.mxu0 0
        %924 = vmatpush1.bf16.xpose.msra.mxu0 0
        %925 = vmatprep.subr.bf16.mxu0 0
        %926 = vmatpush1.bf16.xpose.msra.mxu0 0
        %927 = vmatprep.subr.bf16.mxu0 0
        %928 = vmatpush1.bf16.xpose.msra.mxu0 0
        %929 = vmatprep.subr.bf16.mxu0 0
        %930 = vmatpush1.bf16.xpose.msra.mxu0 0
        %931 = vmatprep.subr.bf16.mxu0 0
        %932 = vmatpush1.bf16.xpose.msra.mxu0 0
        %933 = vmatprep.subr.bf16.mxu0 0
        %934 = vmatpush1.bf16.xpose.msra.mxu0 0
        %935 = vmatprep.subr.bf16.mxu0 0
        %936 = vmatpush1.bf16.xpose.msra.mxu0 0
        %937 = vmatprep.subr.bf16.mxu0 0
        %938 = vmatpush1.bf16.xpose.msra.mxu0 0
        %939 = vmatprep.subr.bf16.mxu0 0
        %940 = vmatpush1.bf16.xpose.msra.mxu0 0
        %941 = vmatprep.subr.bf16.mxu0 0
        %942 = vmatpush1.bf16.xpose.msra.mxu0 0
        %943 = vmatprep.subr.bf16.mxu0 0
        %944 = vmatpush1.bf16.xpose.msra.mxu0 0
        %945 = vmatprep.subr.bf16.mxu0 0
        %946 = vmatpush1.bf16.xpose.msra.mxu0 0
        %947 = vmatprep.mubr.bf16.mxu0 0
        %948 = vmatmul.mubr.bf16.gmra.mrb[0].mxu0 %v910
        %v949 = vpop.f32.mrb[0].mxu0
        %v950 = vadd.f32 0.0, %v949
        %v951 = vpop.f32.mrb[0].mxu0
        %v952 = vpop.f32.mrb[0].mxu0
        %v953 = vpop.f32.mrb[0].mxu0
        %954 = vdwg.mxu0
        %v955 = vsel %vm687, %v950, -inf
        %956 = vmax.xlane.f32.xlu0 %v955
        %v957 = vpop.xlane.xlu0 %956
        %v958 = vsub.f32 %v950, %v957
        %v959 = vmul.f32 %v958, 1.442695
        %v960 = vpow.pop %v959
        %v961 = vsel %vm687, %v960, 0.0
        %962 = vadd.xlane.f32.xlu0 %v961
        %v963 = vpop.xlane.xlu0 %962
        %v964 = vrcp.pop %v963
        %v965 = vmul.f32 %v960, %v964
        %v966 = vpack.c.bf16 %v965, %v965
        %967 = vrot.lane.b32.xlu0 %v683, 48
        %v968 = vpop.permute.xlu0 %967
        %v970 = vsel %vm687, %v966, 0
        %v973 = vsel %vm751, %v968, 0
        %975 = vmatprep.subr.bf16.mxu0 0
        %976 = vmatpush1.bf16.msra.mxu0 %v973
        %977 = vmatprep.subr.bf16.mxu0 0
        %978 = vmatpush1.bf16.msra.mxu0 0
        %979 = vmatprep.subr.bf16.mxu0 0
        %980 = vmatpush1.bf16.msra.mxu0 0
        %981 = vmatprep.subr.bf16.mxu0 0
        %982 = vmatpush1.bf16.msra.mxu0 0
        %983 = vmatprep.subr.bf16.mxu0 0
        %984 = vmatpush1.bf16.msra.mxu0 0
        %985 = vmatprep.subr.bf16.mxu0 0
        %986 = vmatpush1.bf16.msra.mxu0 0
        %987 = vmatprep.subr.bf16.mxu0 0
        %988 = vmatpush1.bf16.msra.mxu0 0
        %989 = vmatprep.subr.bf16.mxu0 0
        %990 = vmatpush1.bf16.msra.mxu0 0
        %991 = vmatprep.subr.bf16.mxu0 0
        %992 = vmatpush1.bf16.msra.mxu0 0
        %993 = vmatprep.subr.bf16.mxu0 0
        %994 = vmatpush1.bf16.msra.mxu0 0
        %995 = vmatprep.subr.bf16.mxu0 0
        %996 = vmatpush1.bf16.msra.mxu0 0
        %997 = vmatprep.subr.bf16.mxu0 0
        %998 = vmatpush1.bf16.msra.mxu0 0
        %999 = vmatprep.subr.bf16.mxu0 0
        %1000 = vmatpush1.bf16.msra.mxu0 0
        %1001 = vmatprep.subr.bf16.mxu0 0
        %1002 = vmatpush1.bf16.msra.mxu0 0
        %1003 = vmatprep.subr.bf16.mxu0 0
        %1004 = vmatpush1.bf16.msra.mxu0 0
        %1005 = vmatprep.subr.bf16.mxu0 0
        %1006 = vmatpush1.bf16.msra.mxu0 0
        %1007 = vmatprep.mubr.bf16.mxu0 0
        %1008 = vmatmul.mubr.bf16.gmra.mrb[0].mxu0 %v970
        %v1009 = vpop.f32.mrb[0].mxu0
        %v1010 = vadd.f32 0.0, %v1009
        %v1011 = vpop.f32.mrb[0].mxu0
        %v1012 = vpop.f32.mrb[0].mxu0
        %v1013 = vpop.f32.mrb[0].mxu0
        %1014 = vdwg.mxu0
        %1015 = vrot.lane.b32.xlu0 %v683, 104
        %v1016 = vpop.permute.xlu0 %1015
        %1017 = vrot.lane.b32.xlu0 %v683, 72
        %v1018 = vpop.permute.xlu0 %1017
        %v1020 = vsel %vm687, %v1016, 0
        %v1023 = vsel %vm687, %v1018, 0
        %1025 = vmatprep.subr.bf16.mxu0 0
        %1026 = vmatpush1.bf16.xpose.msra.mxu0 %v1023
        %1027 = vmatprep.subr.bf16.mxu0 0
        %1028 = vmatpush1.bf16.xpose.msra.mxu0 0
        %1029 = vmatprep.subr.bf16.mxu0 0
        %1030 = vmatpush1.bf16.xpose.msra.mxu0 0
        %1031 = vmatprep.subr.bf16.mxu0 0
        %1032 = vmatpush1.bf16.xpose.msra.mxu0 0
        %1033 = vmatprep.subr.bf16.mxu0 0
        %1034 = vmatpush1.bf16.xpose.msra.mxu0 0
        %1035 = vmatprep.subr.bf16.mxu0 0
        %1036 = vmatpush1.bf16.xpose.msra.mxu0 0
        %1037 = vmatprep.subr.bf16.mxu0 0
        %1038 = vmatpush1.bf16.xpose.msra.mxu0 0
        %1039 = vmatprep.subr.bf16.mxu0 0
        %1040 = vmatpush1.bf16.xpose.msra.mxu0 0
        %1041 = vmatprep.subr.bf16.mxu0 0
        %1042 = vmatpush1.bf16.xpose.msra.mxu0 0
        %1043 = vmatprep.subr.bf16.mxu0 0
        %1044 = vmatpush1.bf16.xpose.msra.mxu0 0
        %1045 = vmatprep.subr.bf16.mxu0 0
        %1046 = vmatpush1.bf16.xpose.msra.mxu0 0
        %1047 = vmatprep.subr.bf16.mxu0 0
        %1048 = vmatpush1.bf16.xpose.msra.mxu0 0
        %1049 = vmatprep.subr.bf16.mxu0 0
        %1050 = vmatpush1.bf16.xpose.msra.mxu0 0
        %1051 = vmatprep.subr.bf16.mxu0 0
        %1052 = vmatpush1.bf16.xpose.msra.mxu0 0
        %1053 = vmatprep.subr.bf16.mxu0 0
        %1054 = vmatpush1.bf16.xpose.msra.mxu0 0
        %1055 = vmatprep.subr.bf16.mxu0 0
        %1056 = vmatpush1.bf16.xpose.msra.mxu0 0
        %1057 = vmatprep.mubr.bf16.mxu0 0
        %1058 = vmatmul.mubr.bf16.gmra.mrb[0].mxu0 %v1020
        %v1059 = vpop.f32.mrb[0].mxu0
        %v1060 = vadd.f32 0.0, %v1059
        %v1061 = vpop.f32.mrb[0].mxu0
        %v1062 = vpop.f32.mrb[0].mxu0
        %v1063 = vpop.f32.mrb[0].mxu0
        %1064 = vdwg.mxu0
        %v1065 = vsel %vm687, %v1060, -inf
        %1066 = vmax.xlane.f32.xlu0 %v1065
        %v1067 = vpop.xlane.xlu0 %1066
        %v1068 = vsub.f32 %v1060, %v1067
        %v1069 = vmul.f32 %v1068, 1.442695
        %v1070 = vpow.pop %v1069
        %v1071 = vsel %vm687, %v1070, 0.0
        %1072 = vadd.xlane.f32.xlu0 %v1071
        %v1073 = vpop.xlane.xlu0 %1072
        %v1074 = vrcp.pop %v1073
        %v1075 = vmul.f32 %v1070, %v1074
        %v1076 = vpack.c.bf16 %v1075, %v1075
        %1077 = vrot.lane.b32.xlu0 %v683, 40
        %v1078 = vpop.permute.xlu0 %1077
        %v1080 = vsel %vm687, %v1076, 0
        %v1083 = vsel %vm751, %v1078, 0
        %1085 = vmatprep.subr.bf16.mxu0 0
        %1086 = vmatpush1.bf16.msra.mxu0 %v1083
        %1087 = vmatprep.subr.bf16.mxu0 0
        %1088 = vmatpush1.bf16.msra.mxu0 0
        %1089 = vmatprep.subr.bf16.mxu0 0
        %1090 = vmatpush1.bf16.msra.mxu0 0
        %1091 = vmatprep.subr.bf16.mxu0 0
        %1092 = vmatpush1.bf16.msra.mxu0 0
        %1093 = vmatprep.subr.bf16.mxu0 0
        %1094 = vmatpush1.bf16.msra.mxu0 0
        %1095 = vmatprep.subr.bf16.mxu0 0
        %1096 = vmatpush1.bf16.msra.mxu0 0
        %1097 = vmatprep.subr.bf16.mxu0 0
        %1098 = vmatpush1.bf16.msra.mxu0 0
        %1099 = vmatprep.subr.bf16.mxu0 0
        %1100 = vmatpush1.bf16.msra.mxu0 0
        %1101 = vmatprep.subr.bf16.mxu0 0
        %1102 = vmatpush1.bf16.msra.mxu0 0
        %1103 = vmatprep.subr.bf16.mxu0 0
        %1104 = vmatpush1.bf16.msra.mxu0 0
        %1105 = vmatprep.subr.bf16.mxu0 0
        %1106 = vmatpush1.bf16.msra.mxu0 0
        %1107 = vmatprep.subr.bf16.mxu0 0
        %1108 = vmatpush1.bf16.msra.mxu0 0
        %1109 = vmatprep.subr.bf16.mxu0 0
        %1110 = vmatpush1.bf16.msra.mxu0 0
        %1111 = vmatprep.subr.bf16.mxu0 0
        %1112 = vmatpush1.bf16.msra.mxu0 0
        %1113 = vmatprep.subr.bf16.mxu0 0
        %1114 = vmatpush1.bf16.msra.mxu0 0
        %1115 = vmatprep.subr.bf16.mxu0 0
        %1116 = vmatpush1.bf16.msra.mxu0 0
        %1117 = vmatprep.mubr.bf16.mxu0 0
        %1118 = vmatmul.mubr.bf16.gmra.mrb[0].mxu0 %v1080
        %v1119 = vpop.f32.mrb[0].mxu0
        %v1120 = vadd.f32 0.0, %v1119
        %v1121 = vpop.f32.mrb[0].mxu0
        %v1122 = vpop.f32.mrb[0].mxu0
        %v1123 = vpop.f32.mrb[0].mxu0
        %1124 = vdwg.mxu0
        %1126 = vrot.lane.b32.xlu0 %v900, 8
        %v1127 = vpop.permute.xlu0 %1126
        %1130 = vrot.lane.b32.xlu0 %v1010, 16
        %v1131 = vpop.permute.xlu0 %1130
        %1134 = vrot.lane.b32.xlu0 %v1120, 24
        %v1135 = vpop.permute.xlu0 %1134
        %v1137 = vsel %vm687, %v790, %v1127
        %vm1138 = vcmask 130048
        %v1139 = vsel %vm1138, %v1137, %v1131
        %vm1140 = vcmask 195584
        %v1141 = vsel %vm1140, %v1139, %v1135
        %v1142 = vpack.c.bf16 %v1141, %v1141
        %v1143 = vld [vmem:[%s570] sm:$0xf]
        %v1144 = vld [vmem:[%s570 + $0x4] sm:$0xf]
        %v1145 = vld [vmem:[%s570 + $0x8] sm:$0xf]
        %v1146 = vld [vmem:[%s570 + $0xc] sm:$0xf]
        %v1147 = vld [vmem:[%s573] sm:$0x1]
        %v1149 = vlaneseq
        %v1150 = vshrl.u32 %v1149, 7
        %v1151 = vsub.s32 0, %v1150
        %v1152 = vrot.slane %v1147, %v1151
        %v1158 = vunpack.c.l.b16 %v1143
        %v1159 = vunpack.c.l.b16 %v1144
        %v1160 = vunpack.c.l.b16 %v1145
        %v1161 = vunpack.c.l.b16 %v1146
        %v1162 = vpack.c.b16 %v1159, %v1158
        %v1163 = vpack.c.b16 %v1161, %v1160
        %v1167 = vsel %vm601, %v1142, 0
        %1169 = vmatprep.subr.bf16.mxu0 0
        %1170 = vmatpush1.bf16.msra.mxu0 %v1162
        %1171 = vmatprep.subr.bf16.mxu0 0
        %1172 = vmatpush1.bf16.msra.mxu0 %v1163
        %1173 = vmatprep.subr.bf16.mxu0 0
        %1174 = vmatpush1.bf16.msra.mxu0 0
        %1175 = vmatprep.subr.bf16.mxu0 0
        %1176 = vmatpush1.bf16.msra.mxu0 0
        %1177 = vmatprep.subr.bf16.mxu0 0
        %1178 = vmatpush1.bf16.msra.mxu0 0
        %1179 = vmatprep.subr.bf16.mxu0 0
        %1180 = vmatpush1.bf16.msra.mxu0 0
        %1181 = vmatprep.subr.bf16.mxu0 0
        %1182 = vmatpush1.bf16.msra.mxu0 0
        %1183 = vmatprep.subr.bf16.mxu0 0
        %1184 = vmatpush1.bf16.msra.mxu0 0
        %1185 = vmatprep.subr.bf16.mxu0 0
        %1186 = vmatpush1.bf16.msra.mxu0 0
        %1187 = vmatprep.subr.bf16.mxu0 0
        %1188 = vmatpush1.bf16.msra.mxu0 0
        %1189 = vmatprep.subr.bf16.mxu0 0
        %1190 = vmatpush1.bf16.msra.mxu0 0
        %1191 = vmatprep.subr.bf16.mxu0 0
        %1192 = vmatpush1.bf16.msra.mxu0 0
        %1193 = vmatprep.subr.bf16.mxu0 0
        %1194 = vmatpush1.bf16.msra.mxu0 0
        %1195 = vmatprep.subr.bf16.mxu0 0
        %1196 = vmatpush1.bf16.msra.mxu0 0
        %1197 = vmatprep.subr.bf16.mxu0 0
        %1198 = vmatpush1.bf16.msra.mxu0 0
        %1199 = vmatprep.subr.bf16.mxu0 0
        %1200 = vmatpush1.bf16.msra.mxu0 0
        %1201 = vmatprep.mubr.bf16.mxu0 0
        %1202 = vmatmul.mubr.bf16.gmra.mrb[0].mxu0 %v1167
        %v1203 = vpop.f32.mrb[0].mxu0
        %v1204 = vadd.f32 %v1152, %v1203
        %v1205 = vpop.f32.mrb[0].mxu0
        %v1206 = vpop.f32.mrb[0].mxu0
        %v1207 = vpop.f32.mrb[0].mxu0
        %1208 = vdwg.mxu0
        %v1209 = vadd.f32 %v600, %v1204
        %v1210 = vsel %vm601, %v1209, 0.0
        %1211 = vadd.xlane.f32.xlu0 %v1210
        %v1212 = vpop.xlane.xlu0 %1211
        %v1213 = vmul.f32 %v1212, %v605
        %v1214 = vsub.f32 %v1209, %v1213
        %v1215 = vmul.f32 %v1214, %v1214
        %v1216 = vsel %vm601, %v1215, 0.0
        %1217 = vadd.xlane.f32.xlu0 %v1216
        %v1218 = vpop.xlane.xlu0 %1217
        %v1219 = vmul.f32 %v1218, %v605
        %v1220 = vadd.f32 %v1219, 1e-06
        %v1221 = vrsqrt.pop %v1220
        %v1222 = vmul.f32 %v1214, %v1221
        %v1223 = vpack.c.bf16 %v1222, %v1222
        %v1224 = vld [vmem:[%s578] sm:$0xf]
        %v1225 = vld [vmem:[%s578 + $0x4] sm:$0xf]
        %v1226 = vld [vmem:[%s578 + $0x8] sm:$0xf]
        %v1227 = vld [vmem:[%s578 + $0xc] sm:$0xf]
        %v1228 = vld [vmem:[%s581] sm:$0x1]
        %v1230 = vlaneseq
        %v1231 = vshrl.u32 %v1230, 7
        %v1232 = vsub.s32 0, %v1231
        %v1233 = vrot.slane %v1228, %v1232
        %v1239 = vunpack.c.l.b16 %v1224
        %v1240 = vunpack.c.l.b16 %v1225
        %v1241 = vunpack.c.l.b16 %v1226
        %v1242 = vunpack.c.l.b16 %v1227
        %v1243 = vpack.c.b16 %v1240, %v1239
        %v1244 = vpack.c.b16 %v1242, %v1241
        %v1248 = vsel %vm601, %v1223, 0
        %1250 = vmatprep.subr.bf16.mxu0 0
        %1251 = vmatpush1.bf16.msra.mxu0 %v1243
        %1252 = vmatprep.subr.bf16.mxu0 0
        %1253 = vmatpush1.bf16.msra.mxu0 %v1244
        %1254 = vmatprep.subr.bf16.mxu0 0
        %1255 = vmatpush1.bf16.msra.mxu0 0
        %1256 = vmatprep.subr.bf16.mxu0 0
        %1257 = vmatpush1.bf16.msra.mxu0 0
        %1258 = vmatprep.subr.bf16.mxu0 0
        %1259 = vmatpush1.bf16.msra.mxu0 0
        %1260 = vmatprep.subr.bf16.mxu0 0
        %1261 = vmatpush1.bf16.msra.mxu0 0
        %1262 = vmatprep.subr.bf16.mxu0 0
        %1263 = vmatpush1.bf16.msra.mxu0 0
        %1264 = vmatprep.subr.bf16.mxu0 0
        %1265 = vmatpush1.bf16.msra.mxu0 0
        %1266 = vmatprep.subr.bf16.mxu0 0
        %1267 = vmatpush1.bf16.msra.mxu0 0
        %1268 = vmatprep.subr.bf16.mxu0 0
        %1269 = vmatpush1.bf16.msra.mxu0 0
        %1270 = vmatprep.subr.bf16.mxu0 0
        %1271 = vmatpush1.bf16.msra.mxu0 0
        %1272 = vmatprep.subr.bf16.mxu0 0
        %1273 = vmatpush1.bf16.msra.mxu0 0
        %1274 = vmatprep.subr.bf16.mxu0 0
        %1275 = vmatpush1.bf16.msra.mxu0 0
        %1276 = vmatprep.subr.bf16.mxu0 0
        %1277 = vmatpush1.bf16.msra.mxu0 0
        %1278 = vmatprep.subr.bf16.mxu0 0
        %1279 = vmatpush1.bf16.msra.mxu0 0
        %1280 = vmatprep.subr.bf16.mxu0 0
        %1281 = vmatpush1.bf16.msra.mxu0 0
        %1282 = vmatprep.mubr.bf16.mxu0 0
        %1283 = vmatmul.mubr.bf16.gmra.mrb[0].mxu0 %v1248
        %v1284 = vpop.f32.mrb[0].mxu0
        %v1285 = vadd.f32 %v1233, %v1284
        %v1286 = vpop.f32.mrb[0].mxu0
        %v1287 = vpop.f32.mrb[0].mxu0
        %v1288 = vpop.f32.mrb[0].mxu0
        %1289 = vdwg.mxu0
        %v1290 = vmul.f32 %v1285, %v1285
        %v1291 = vmul.f32 %v1285, %v1290
        %v1292 = vmul.f32 %v1291, 0.044715
        %v1293 = vadd.f32 %v1285, %v1292
        %v1294 = vmul.f32 %v1293, 0.7978846
        %v1295 = vtanh.pop %v1294
        %v1296 = vadd.f32 %v1295, 1.0
        %v1297 = vmul.f32 %v1296, 0.5
        %v1298 = vmul.f32 %v1285, %v1297
        %v1299 = vpack.c.bf16 %v1298, %v1298
        %v1300 = vld [vmem:[%s586] sm:$0xf]
        %v1301 = vld [vmem:[%s586 + $0x4] sm:$0xf]
        %v1302 = vld [vmem:[%s586 + $0x8] sm:$0xf]
        %v1303 = vld [vmem:[%s586 + $0xc] sm:$0xf]
        %v1304 = vld [vmem:[%s586 + $0x10] sm:$0xf]
        %v1305 = vld [vmem:[%s586 + $0x14] sm:$0xf]
        %v1306 = vld [vmem:[%s586 + $0x18] sm:$0xf]
        %v1307 = vld [vmem:[%s586 + $0x1c] sm:$0xf]
        %v1308 = vld [vmem:[%s589] sm:$0x1]
        %v1310 = vlaneseq
        %v1311 = vshrl.u32 %v1310, 7
        %v1312 = vsub.s32 0, %v1311
        %v1313 = vrot.slane %v1308, %v1312
        %v1323 = vunpack.c.l.b16 %v1300
        %v1324 = vunpack.c.l.b16 %v1301
        %v1325 = vunpack.c.l.b16 %v1302
        %v1326 = vunpack.c.l.b16 %v1303
        %v1327 = vunpack.c.l.b16 %v1304
        %v1328 = vunpack.c.l.b16 %v1305
        %v1329 = vunpack.c.l.b16 %v1306
        %v1330 = vunpack.c.l.b16 %v1307
        %v1331 = vpack.c.b16 %v1324, %v1323
        %v1332 = vpack.c.b16 %v1326, %v1325
        %v1333 = vpack.c.b16 %v1328, %v1327
        %v1334 = vpack.c.b16 %v1330, %v1329
        %vm1339 = vcmask 523264
        %v1341 = vsel %vm1339, %v1299, 0
        %1343 = vmatprep.subr.bf16.mxu0 0
        %1344 = vmatpush1.bf16.msra.mxu0 %v1331
        %1345 = vmatprep.subr.bf16.mxu0 0
        %1346 = vmatpush1.bf16.msra.mxu0 %v1332
        %1347 = vmatprep.subr.bf16.mxu0 0
        %1348 = vmatpush1.bf16.msra.mxu0 %v1333
        %1349 = vmatprep.subr.bf16.mxu0 0
        %1350 = vmatpush1.bf16.msra.mxu0 %v1334
        %1351 = vmatprep.subr.bf16.mxu0 0
        %1352 = vmatpush1.bf16.msra.mxu0 0
        %1353 = vmatprep.subr.bf16.mxu0 0
        %1354 = vmatpush1.bf16.msra.mxu0 0
        %1355 = vmatprep.subr.bf16.mxu0 0
        %1356 = vmatpush1.bf16.msra.mxu0 0
        %1357 = vmatprep.subr.bf16.mxu0 0
        %1358 = vmatpush1.bf16.msra.mxu0 0
        %1359 = vmatprep.subr.bf16.mxu0 0
        %1360 = vmatpush1.bf16.msra.mxu0 0
        %1361 = vmatprep.subr.bf16.mxu0 0
        %1362 = vmatpush1.bf16.msra.mxu0 0
        %1363 = vmatprep.subr.bf16.mxu0 0
        %1364 = vmatpush1.bf16.msra.mxu0 0
        %1365 = vmatprep.subr.bf16.mxu0 0
        %1366 = vmatpush1.bf16.msra.mxu0 0
        %1367 = vmatprep.subr.bf16.mxu0 0
        %1368 = vmatpush1.bf16.msra.mxu0 0
        %1369 = vmatprep.subr.bf16.mxu0 0
        %1370 = vmatpush1.bf16.msra.mxu0 0
        %1371 = vmatprep.subr.bf16.mxu0 0
        %1372 = vmatpush1.bf16.msra.mxu0 0
        %1373 = vmatprep.subr.bf16.mxu0 0
        %1374 = vmatpush1.bf16.msra.mxu0 0
        %1375 = vmatprep.mubr.bf16.mxu0 0
        %1376 = vmatmul.mubr.bf16.gmra.mrb[0].mxu0 %v1341
        %v1377 = vpop.f32.mrb[0].mxu0
        %v1378 = vadd.f32 %v1313, %v1377
        %v1379 = vpop.f32.mrb[0].mxu0
        %v1380 = vpop.f32.mrb[0].mxu0
        %v1381 = vpop.f32.mrb[0].mxu0
        %1382 = vdwg.mxu0
        %v1383 = vadd.f32 %v1209, %v1378
        %p1384 = scmp.lt.s32.totalorder %s35, 1
        // Predicated region
        $region81: #{tpu_custom_call.1} parent=67 // pred_check
          %p1385 = pneg %p1384
        $region82: #{tpu_custom_call.1} parent=67 // pred_check_branch
          %1387 = sbr.rel (%p1385) target = $region84
        $region83: #{tpu_custom_call.1} parent=67 // pred_region
          %1388 = vst.msk [vmem:[%s557] sm:$0xff] %vm601, %v1383
        $region84: #{tpu_custom_call.1} parent=67 // pred_fallthru
          _
        %p1389 = scmp.eq.s32.totalorder %s35, 1
        // Predicated region
        $region85: #{tpu_custom_call.1} parent=67 // pred_check
          %p1390 = pneg %p1389
        $region86: #{tpu_custom_call.1} parent=67 // pred_check_branch
          %1392 = sbr.rel (%p1390) target = $region88
        $region87: #{tpu_custom_call.1} parent=67 // pred_region
          %v1393 = vsel %vm601, %v1383, 0.0
          %1394 = vadd.xlane.f32.xlu0 %v1393
          %v1395 = vpop.xlane.xlu0 %1394
          %v1396 = vmul.f32 %v1395, %v605
          %v1397 = vsub.f32 %v1383, %v1396
          %v1398 = vmul.f32 %v1397, %v1397
          %v1399 = vsel %vm601, %v1398, 0.0
          %1400 = vadd.xlane.f32.xlu0 %v1399
          %v1401 = vpop.xlane.xlu0 %1400
          %v1402 = vmul.f32 %v1401, %v605
          %v1403 = vadd.f32 %v1402, 1e-06
          %v1404 = vrsqrt.pop %v1403
          %v1405 = vmul.f32 %v1397, %v1404
          %v1406 = vld [vmem:[%s10] sm:$0x1]
          %v1408 = vlaneseq
          %v1409 = vshrl.u32 %v1408, 7
          %v1410 = vsub.s32 0, %v1409
          %v1411 = vrot.slane %v1406, %v1410
          %v1413 = vmul.f32 %v1405, %v1411
          %v1414 = vld [vmem:[%s11] sm:$0x1]
          %v1416 = vlaneseq
          %v1417 = vshrl.u32 %v1416, 7
          %v1418 = vsub.s32 0, %v1417
          %v1419 = vrot.slane %v1414, %v1418
          %v1421 = vadd.f32 %v1413, %v1419
          %1422 = vst.msk [vmem:[%s557] sm:$0xff] %vm601, %v1421
        $region88: #{tpu_custom_call.1} parent=67 // pred_fallthru
          _
        %s1423 = sand.u32 %s347, 1
        %s1424 = scalar_lea.sflag [#allocation4], %s1423
        %s1425 = sand.u32 %s347, 1
        %s1426 = smul.addr %s1425, 8
        %s1427 = scalar_lea.vmem [#allocation7], %s1426
        // Predicated region
        $region89: #{tpu_custom_call.1} parent=67 // pred_check
          %p1428 = pneg %p357
        $region90: #{tpu_custom_call.1} parent=67 // pred_check_branch
          %1430 = sbr.rel (%p1428) target = $region92
        $region91: #{tpu_custom_call.1} parent=67 // pred_region
          %s1432 = ssub.s32 128, 128
          %1433 = vsyncadd %s1424, %s1432
          %s1434 = smul.addr %s34, 128
          %s1435 = scalar_lea.hbm %s12, %s1434
          %s1437 = sshll.u32 %s1427, 4
          %s1438 = int_to_ptr.vmem [resolvable:$true] %s1437
          %1440 = dma.vmem_to_hbm [thread:$0]  %s1438, 128, %s1435, %s1424
        $region92: #{tpu_custom_call.1} parent=67 // pred_fallthru
          _
      $region68: #{tpu_custom_call.1} parent=5 // pred_fallthru
        _
      %p1441 = scmp.le.s32.totalorder 2, %s25
      // Predicated region
      $region93: #{tpu_custom_call.1} parent=5 // pred_check
        %p1442 = pneg %p1441
      $region94: #{tpu_custom_call.1} parent=5 // pred_check_branch
        %1444 = sbr.rel (%p1442) target = $region96
      $region95: #{tpu_custom_call.1} parent=5 // pred_region
        %s1445 = ssub.s32 %s25, 2
        // Predicated region
        $region97: #{tpu_custom_call.1} parent=95 // pred_check
          %p1446 = pneg %p363
        $region98: #{tpu_custom_call.1} parent=95 // pred_check_branch
          %1448 = sbr.rel (%p1446) target = $region100
        $region99: #{tpu_custom_call.1} parent=95 // pred_region
          %s1449 = sand.u32 %s348, 1
          %s1450 = scalar_lea.sflag [#allocation4], %s1449
          %s1451 = sand.u32 %s348, 1
          %s1452 = smul.addr %s1451, 8
          %s1453 = scalar_lea.vmem [#allocation7], %s1452
          %1454 = dma.done %s1450, 128
        $region100: #{tpu_custom_call.1} parent=95 // pred_fallthru
          _
      $region96: #{tpu_custom_call.1} parent=5 // pred_fallthru
        _
    $region6: #{tpu_custom_call.1} parent=1 // loop_footer
      %s29 = sadd.s32 1, %s25
    $region7: #{tpu_custom_call.1} parent=1 // loop_footer_branch
      %24 = sbr.rel target = $region3
    $region8: #{tpu_custom_call.1} parent=1 // loop_exit
      _
    %1455 = vsyncpa [#allocation3], 1
    %s1456 = scalar_lea.sflag [#allocation3], 1
    %1457 = vsyncpa %s1456, 1
    %1458 = vsyncpa [#allocation6], 1
    %1459 = vsyncpa [#allocation4], 1
    %s1460 = scalar_lea.sflag [#allocation4], 1
    %1461 = vsyncpa %s1460, 1

</llo_original>
